<compile_context>
chip_gen: v6e
topology: v6e:2x2x1
jax: 0.10.0
libtpu: 0.0.40
codegen_flags: <defaults>
</compile_context>

<pallas_src>
import jax
import jax.numpy as jnp
from jax.experimental import pallas as pl
from jax.experimental.pallas import tpu as pltpu


def _pick_batch_block(B, H, W, CIN, HID, CIMG, budget_bytes=40 * 1024 * 1024):
    """Largest batch block BB that (a) leaves >= 2 grid steps so both v7x
    TensorCores get work and (b) keeps the per-step VMEM footprint inside a
    conservative budget (safe against v7x's 64 MiB physical VMEM)."""
    H2 = 2 * HID
    pad_hw = (H + 2) * (W + 2)
    max_bb = max(B // 2, 1)

    def fits(bb):
        m = bb * H * W
        apad_in = 2 * bb * pad_hw * CIN * 4            # double-buffered input block
        ximg_in = 2 * bb * H * W * CIMG * 4            # double-buffered input block
        out_blk = 2 * bb * H * W * (CIMG + 1) * 4      # double-buffered output block
        hpad = bb * pad_hw * H2 * 4                    # scratch (single buffer)
        weights = (9 * CIN * H2 + 9 * H2 * (1 + CIMG)) * 2 + (H2 + 1 + CIMG) * 4
        transient = 4 * m * (H2 + CIN + (1 + CIMG)) * 4  # taps / accumulators headroom
        return apad_in + ximg_in + out_blk + hpad + weights + transient <= budget_bytes

    for cand in (32, 16, 8, 4, 2, 1):
        if cand <= max_bb and B % cand == 0 and fits(cand):
            return cand
    return 1


def _make_tirg_kernel(BB, H, W, CIN, HID, CIMG):
    """One grid step == BB batch elements. All convs are 3x3, pad=1, stride=1."""
    H2 = 2 * HID
    M = BB * H * W
    COUT = 1 + CIMG

    def kernel(ximg_ref, apad_ref, w1_ref, sh2_ref, w2_ref, b2_ref, wgate_ref,
               out_ref, hpad):
        # ---- branch-1 conv3x3 ([gate|res] fused along cout; BN2 scale folded
        #      into w1): 9 tap-wise bf16 matmuls, f32 accumulation.  No
        #      materialized im2col patch matrix. ----
        acc1 = jnp.zeros((M, H2), jnp.float32)
        for t in range(9):
            dy, dx = divmod(t, 3)
            tap = apad_ref[:, dy:dy + H, dx:dx + W, :].reshape(M, CIN)
            acc1 = acc1 + jnp.dot(tap.astype(jnp.bfloat16), w1_ref[t],
                                  preferred_element_type=jnp.float32)
        # BN2 shift (conv1 bias already folded in) + ReLU
        h = jnp.maximum(acc1 + sh2_ref[...], 0.0)               # (M, 2*HID) f32

        # ---- padded hidden scratch: zero only the 1-px border.  Done per step
        #      (not under program_id()==0) so it stays correct when the
        #      "parallel" batch axis is sharded across TensorCores and a core's
        #      first iteration is not iteration 0; interior is fully rewritten.
        row0 = jnp.zeros((BB, 1, W + 2, H2), jnp.float32)
        col0 = jnp.zeros((BB, H + 2, 1, H2), jnp.float32)
        hpad[:, 0:1, :, :] = row0
        hpad[:, H + 1:H + 2, :, :] = row0
        hpad[:, :, 0:1, :] = col0
        hpad[:, :, W + 1:W + 2, :] = col0
        hpad[:, 1:H + 1, 1:W + 1, :] = h.reshape(BB, H, W, H2)

        # ---- branch-2 conv3x3 (block-diagonal fused weight, columns
        #      [gate_logit | res]; w_res already folded into the res part) ----
        acc2 = jnp.zeros((M, COUT), jnp.float32)
        for t in range(9):
            dy, dx = divmod(t, 3)
            tap = hpad[:, dy:dy + H, dx:dx + W, :].reshape(M, H2)
            acc2 = acc2 + jnp.dot(tap.astype(jnp.bfloat16), w2_ref[t],
                                  preferred_element_type=jnp.float32)
        o2 = acc2 + b2_ref[...]                                 # (M, 1+CIMG)
        gate = jax.nn.sigmoid(o2[:, 0:1])                       # (M, 1)
        res = o2[:, 1:]                                         # already * w_res

        # ---- y = w_gate * (gate * x_img) + res ; single combined output slab
        #      with columns [y | gate] -> one output DMA stream. ----
        ximg = ximg_ref[...].reshape(M, CIMG)
        y = wgate_ref[0, 0] * (gate * ximg) + res
        out_ref[...] = jnp.concatenate([y, gate], axis=-1).reshape(BB, H * W, COUT)

    return kernel


def tirg_pallas(x_img, x_txt, params):
    """x_img, x_txt are NHWC. Returns (y, gate) in NHWC."""
    B, H, W, Cimg = x_img.shape
    Cin = Cimg + x_txt.shape[-1]
    HID = params["wg1"].shape[-1]
    H2 = 2 * HID
    Cout = 1 + Cimg

    # ---- stem: torch.cat([x_img, x_txt], dim=1) == channel concat in NHWC,
    #      eval-mode BN1 + ReLU, zero spatial padding (conv3x3 pads exactly this
    #      activation).  Done once in XLA so the kernel needs no padded-stem
    #      scratch / border masking. ----
    x = jnp.concatenate([x_img, x_txt], axis=-1)
    a = jnp.maximum(x * params["s1"].reshape(1, 1, 1, Cin)
                    + params["sh1"].reshape(1, 1, 1, Cin), 0.0)
    a_pad = jnp.pad(a, ((0, 0), (1, 1), (1, 1), (0, 0)))
    x_img_flat = x_img.reshape(B, H * W, Cimg)

    # ---- parameter fusion / folding (glue) ----
    # branch-1 convs fused along cout ([gate | res]); BN2 scale folded into the
    # weight (conv is linear), conv1 bias folded into the BN2 shift:
    #   relu(s*(conv(a)+b) + sh) == relu(conv_{w*s}(a) + (s*b + sh))
    s2 = jnp.concatenate([params["sg2"], params["sr2"]], axis=-1)          # (1, H2)
    w1 = jnp.concatenate([params["wg1"], params["wr1"]], axis=-1)          # (9,Cin,H2)
    w1 = (w1 * s2.reshape(1, 1, H2)).astype(jnp.bfloat16)
    sh2 = jnp.concatenate(
        [params["sg2"] * params["bg1"] + params["shg2"],
         params["sr2"] * params["br1"] + params["shr2"]], axis=-1)         # (1, H2)

    # branch-2 convs fused via a block-diagonal weight -> cols [gate_logit|res],
    # with w_res folded into the res columns and res bias.
    w_res = params["w_res"][0, 0]
    w2 = jnp.zeros((9, H2, Cout), jnp.float32)
    w2 = w2.at[:, :HID, 0:1].set(params["wg2"])
    w2 = w2.at[:, HID:, 1:].set(params["wr2"] * w_res)
    w2 = w2.astype(jnp.bfloat16)
    b2 = jnp.concatenate([params["bg2"], params["br2"] * w_res], axis=-1)  # (1, Cout)

    BB = _pick_batch_block(B, H, W, Cin, HID, Cimg)
    grid = (B // BB,)
    kernel = _make_tirg_kernel(BB, H, W, Cin, HID, Cimg)

    # Grid-invariant tensors live whole in VMEM (single copy, not pipelined /
    # double-buffered); the runtime scalar w_gate lives in SMEM.
    vmem_spec = pl.BlockSpec(memory_space=pltpu.MemorySpace.VMEM)
    smem_spec = pl.BlockSpec(memory_space=pltpu.MemorySpace.SMEM)

    in_specs = [
        pl.BlockSpec((BB, H * W, Cimg), lambda b: (b, 0, 0)),            # x_img
        pl.BlockSpec((BB, H + 2, W + 2, Cin), lambda b: (b, 0, 0, 0)),   # a_pad
        vmem_spec,   # w1  (9, Cin, 2*HID) bf16
        vmem_spec,   # sh2 (1, 2*HID) f32
        vmem_spec,   # w2  (9, 2*HID, 1+Cimg) bf16
        vmem_spec,   # b2  (1, 1+Cimg) f32
        smem_spec,   # w_gate (1, 1) f32
    ]
    out_shape = jax.ShapeDtypeStruct((B, H * W, Cout), jnp.float32)
    out_specs = pl.BlockSpec((BB, H * W, Cout), lambda b: (b, 0, 0))

    out = pl.pallas_call(
        kernel,
        out_shape=out_shape,
        grid_spec=pltpu.PrefetchScalarGridSpec(
            num_scalar_prefetch=0,
            grid=grid,
            in_specs=in_specs,
            out_specs=out_specs,
            scratch_shapes=[
                pltpu.VMEM((BB, H + 2, W + 2, H2), jnp.float32),  # padded hidden
            ],
        ),
        compiler_params=pltpu.CompilerParams(
            dimension_semantics=("parallel",),
            vmem_limit_bytes=64 * 1024 * 1024),
    )(x_img_flat, a_pad, w1, sh2, w2, b2, params["w_gate"])

    y = out[:, :, :Cimg].reshape(B, H, W, Cimg)
    gate = out[:, :, Cimg:].reshape(B, H, W, 1)
    return y, gate


def tirg_ref(x_img, x_txt, params):
    """Pure-JAX f32 reference (lax.conv) for numerical verification."""
    def bn(h, s, sh):
        return h * s.reshape(1, 1, 1, -1) + sh.reshape(1, 1, 1, -1)

    def conv(a, w9, b):
        cin, cout = w9.shape[1], w9.shape[2]
        w = w9.reshape(3, 3, cin, cout)
        o = jax.lax.conv_general_dilated(
            a, w, (1, 1), ((1, 1), (1, 1)),
            dimension_numbers=("NHWC", "HWIO", "NHWC"))
        return o + b.reshape(1, 1, 1, cout)

    x = jnp.concatenate([x_img, x_txt], axis=-1)
    a = jax.nn.relu(bn(x, params["s1"], params["sh1"]))
    hg = jax.nn.relu(bn(conv(a, params["wg1"], params["bg1"]),
                        params["sg2"], params["shg2"]))
    gate = jax.nn.sigmoid(conv(hg, params["wg2"], params["bg2"]))
    hr = jax.nn.relu(bn(conv(a, params["wr1"], params["br1"]),
                        params["sr2"], params["shr2"]))
    res = conv(hr, params["wr2"], params["br2"])
    y = params["w_gate"][0, 0] * (gate * x_img) + params["w_res"][0, 0] * res
    return y, gate


if __name__ == "__main__":
    B, H, W = 2, 8, 8
    IMG_DIM, TXT_DIM, HID = 8, 8, 16
    CIN = IMG_DIM + TXT_DIM
    EPS = 1e-5

    key = jax.random.PRNGKey(0)
    ks = jax.random.split(key, 24)

    # PyTorch-convention NCHW inputs -> transpose to NHWC for the kernel
    x_img_nchw = jax.random.normal(ks[0], (B, IMG_DIM, H, W), jnp.float32)
    x_txt_nchw = jax.random.normal(ks[1], (B, TXT_DIM, H, W), jnp.float32)
    x_img = jnp.transpose(x_img_nchw, (0, 2, 3, 1))
    x_txt = jnp.transpose(x_txt_nchw, (0, 2, 3, 1))

    # Deterministic synthetic parameters. BatchNorm2d is applied in eval mode;
    # (gamma, beta, running_mean, running_var) are folded into per-channel
    # scale/shift in the glue code.
    def bn_fold(kg, kb, km, kv, C):
        gamma = 1.0 + 0.1 * jax.random.normal(kg, (C,), jnp.float32)
        beta = 0.1 * jax.random.normal(kb, (C,), jnp.float32)
        mean = 0.1 * jax.random.normal(km, (C,), jnp.float32)
        var = jax.random.uniform(kv, (C,), jnp.float32, minval=0.5, maxval=1.5)
        scale = gamma * jax.lax.rsqrt(var + EPS)
        shift = beta - mean * scale
        return scale.reshape(1, C), shift.reshape(1, C)

    s1, sh1 = bn_fold(ks[2], ks[3], ks[4], ks[5], CIN)
    sg2, shg2 = bn_fold(ks[6], ks[7], ks[8], ks[9], HID)
    sr2, shr2 = bn_fold(ks[10], ks[11], ks[12], ks[13], HID)

    def conv_w(k, cin, cout):  # HWIO weights, flattened taps -> (9, cin, cout)
        return 0.1 * jax.random.normal(k, (9, cin, cout), jnp.float32)

    params = dict(
        s1=s1, sh1=sh1,
        wg1=conv_w(ks[14], CIN, HID),
        bg1=0.1 * jax.random.normal(ks[15], (1, HID), jnp.float32),
        sg2=sg2, shg2=shg2,
        wg2=conv_w(ks[16], HID, 1),
        bg2=0.1 * jax.random.normal(ks[17], (1, 1), jnp.float32),
        wr1=conv_w(ks[18], CIN, HID),
        br1=0.1 * jax.random.normal(ks[19], (1, HID), jnp.float32),
        sr2=sr2, shr2=shr2,
        wr2=conv_w(ks[20], HID, IMG_DIM),
        br2=0.1 * jax.random.normal(ks[21], (1, IMG_DIM), jnp.float32),
        # module init is w_gate=1, w_res=0; use a nonzero w_res so the check
        # also exercises the fused/folded residual branch.
        w_gate=jnp.full((1, 1), 1.0, jnp.float32),
        w_res=jnp.full((1, 1), 0.3, jnp.float32),
    )

    y, gate = tirg_pallas(x_img, x_txt, params)
    jax.block_until_ready((y, gate))

    y_ref, gate_ref = tirg_ref(x_img, x_txt, params)
    assert y.shape == (B, H, W, IMG_DIM) and gate.shape == (B, H, W, 1)
    # bf16 MXU operands (f32 accumulation) -> relaxed tolerance vs f32 reference
    assert jnp.allclose(y, y_ref, atol=3e-2, rtol=3e-2)
    assert jnp.allclose(gate, gate_ref, atol=3e-2, rtol=3e-2)
    print("KERNEL_OK")
</pallas_src>

<mosaic_0001>
module attributes {stable_mosaic.version = 11 : i64} {
  func.func @kernel(%arg0: i32, %arg1: memref<1x64x8xf32, #tpu.memory_space<vmem>>, %arg2: memref<1x10x10x16xf32, #tpu.memory_space<vmem>>, %arg3: memref<9x16x32xbf16, #tpu.memory_space<vmem>>, %arg4: memref<1x32xf32, #tpu.memory_space<vmem>>, %arg5: memref<9x32x9xbf16, #tpu.memory_space<vmem>>, %arg6: memref<1x9xf32, #tpu.memory_space<vmem>>, %arg7: memref<1x1xf32, #tpu.memory_space<smem>>, %arg8: memref<1x64x9xf32, #tpu.memory_space<vmem>>, %arg9: memref<1x10x10x32xf32, #tpu.memory_space<vmem>>) attributes {dimension_semantics = [#tpu.dimension_semantics<parallel>], iteration_bounds = array<i64: 2>, scalar_prefetch = 0 : i64, scratch_operands = 1 : i64, tpu.core_type = #tpu.core_type<tc>, window_params = [{transform_indices = @transform_0, window_bounds = array<i64: 1, 64, 8>}, {transform_indices = @transform_1, window_bounds = array<i64: 1, 10, 10, 16>}, {pipeline_mode = #tpu.pipeline_mode<synchronous>, transform_indices = @transform_2, window_bounds = array<i64: 9, 16, 32>}, {pipeline_mode = #tpu.pipeline_mode<synchronous>, transform_indices = @transform_3, window_bounds = array<i64: 1, 32>}, {pipeline_mode = #tpu.pipeline_mode<synchronous>, transform_indices = @transform_4, window_bounds = array<i64: 9, 32, 9>}, {pipeline_mode = #tpu.pipeline_mode<synchronous>, transform_indices = @transform_5, window_bounds = array<i64: 1, 9>}, {transform_indices = @transform_6, window_bounds = array<i64: 1, 1>}, {transform_indices = @transform_7, window_bounds = array<i64: 1, 64, 9>}]} {
    %cst = arith.constant 0.000000e+00 : f32
    %0 = vector.broadcast %cst : f32 to vector<64x32xf32>
    %c0 = arith.constant 0 : index
    %c0_0 = arith.constant 0 : index
    %c0_1 = arith.constant 0 : index
    %c0_2 = arith.constant 0 : index
    %1 = vector.load %arg2[%c0, %c0_0, %c0_1, %c0_2] : memref<1x10x10x16xf32, #tpu.memory_space<vmem>>, vector<1x8x8x16xf32>
    %2 = vector.shape_cast %1 : vector<1x8x8x16xf32> to vector<64x16xf32>
    %3 = arith.truncf %2 : vector<64x16xf32> to vector<64x16xbf16>
    %c0_3 = arith.constant 0 : index
    %c0_4 = arith.constant 0 : index
    %c0_5 = arith.constant 0 : index
    %4 = vector.load %arg3[%c0_3, %c0_4, %c0_5] : memref<9x16x32xbf16, #tpu.memory_space<vmem>>, vector<1x16x32xbf16>
    %5 = vector.shape_cast %4 : vector<1x16x32xbf16> to vector<16x32xbf16>
    %cst_6 = arith.constant dense<0.000000e+00> : vector<64x32xf32>
    %6 = tpu.matmul %3, %5, %cst_6 {dimension_numbers = #tpu.dot_dimension_numbers<[1], [0], [0], [1], [0, 0, 1, 1], [], []>} : vector<64x16xbf16>, vector<16x32xbf16>, vector<64x32xf32> -> vector<64x32xf32>
    %7 = arith.addf %0, %6 : vector<64x32xf32>
    %c0_7 = arith.constant 0 : index
    %c0_8 = arith.constant 0 : index
    %c1 = arith.constant 1 : index
    %c0_9 = arith.constant 0 : index
    %8 = vector.load %arg2[%c0_7, %c0_8, %c1, %c0_9] : memref<1x10x10x16xf32, #tpu.memory_space<vmem>>, vector<1x8x8x16xf32>
    %9 = vector.shape_cast %8 : vector<1x8x8x16xf32> to vector<64x16xf32>
    %10 = arith.truncf %9 : vector<64x16xf32> to vector<64x16xbf16>
    %c1_10 = arith.constant 1 : index
    %c0_11 = arith.constant 0 : index
    %c0_12 = arith.constant 0 : index
    %11 = vector.load %arg3[%c1_10, %c0_11, %c0_12] : memref<9x16x32xbf16, #tpu.memory_space<vmem>>, vector<1x16x32xbf16>
    %12 = vector.shape_cast %11 : vector<1x16x32xbf16> to vector<16x32xbf16>
    %cst_13 = arith.constant dense<0.000000e+00> : vector<64x32xf32>
    %13 = tpu.matmul %10, %12, %cst_13 {dimension_numbers = #tpu.dot_dimension_numbers<[1], [0], [0], [1], [0, 0, 1, 1], [], []>} : vector<64x16xbf16>, vector<16x32xbf16>, vector<64x32xf32> -> vector<64x32xf32>
    %14 = arith.addf %7, %13 : vector<64x32xf32>
    %c0_14 = arith.constant 0 : index
    %c0_15 = arith.constant 0 : index
    %c2 = arith.constant 2 : index
    %c0_16 = arith.constant 0 : index
    %15 = vector.load %arg2[%c0_14, %c0_15, %c2, %c0_16] : memref<1x10x10x16xf32, #tpu.memory_space<vmem>>, vector<1x8x8x16xf32>
    %16 = vector.shape_cast %15 : vector<1x8x8x16xf32> to vector<64x16xf32>
    %17 = arith.truncf %16 : vector<64x16xf32> to vector<64x16xbf16>
    %c2_17 = arith.constant 2 : index
    %c0_18 = arith.constant 0 : index
    %c0_19 = arith.constant 0 : index
    %18 = vector.load %arg3[%c2_17, %c0_18, %c0_19] : memref<9x16x32xbf16, #tpu.memory_space<vmem>>, vector<1x16x32xbf16>
    %19 = vector.shape_cast %18 : vector<1x16x32xbf16> to vector<16x32xbf16>
    %cst_20 = arith.constant dense<0.000000e+00> : vector<64x32xf32>
    %20 = tpu.matmul %17, %19, %cst_20 {dimension_numbers = #tpu.dot_dimension_numbers<[1], [0], [0], [1], [0, 0, 1, 1], [], []>} : vector<64x16xbf16>, vector<16x32xbf16>, vector<64x32xf32> -> vector<64x32xf32>
    %21 = arith.addf %14, %20 : vector<64x32xf32>
    %c0_21 = arith.constant 0 : index
    %c1_22 = arith.constant 1 : index
    %c0_23 = arith.constant 0 : index
    %c0_24 = arith.constant 0 : index
    %22 = vector.load %arg2[%c0_21, %c1_22, %c0_23, %c0_24] : memref<1x10x10x16xf32, #tpu.memory_space<vmem>>, vector<1x8x8x16xf32>
    %23 = vector.shape_cast %22 : vector<1x8x8x16xf32> to vector<64x16xf32>
    %24 = arith.truncf %23 : vector<64x16xf32> to vector<64x16xbf16>
    %c3 = arith.constant 3 : index
    %c0_25 = arith.constant 0 : index
    %c0_26 = arith.constant 0 : index
    %25 = vector.load %arg3[%c3, %c0_25, %c0_26] : memref<9x16x32xbf16, #tpu.memory_space<vmem>>, vector<1x16x32xbf16>
    %26 = vector.shape_cast %25 : vector<1x16x32xbf16> to vector<16x32xbf16>
    %cst_27 = arith.constant dense<0.000000e+00> : vector<64x32xf32>
    %27 = tpu.matmul %24, %26, %cst_27 {dimension_numbers = #tpu.dot_dimension_numbers<[1], [0], [0], [1], [0, 0, 1, 1], [], []>} : vector<64x16xbf16>, vector<16x32xbf16>, vector<64x32xf32> -> vector<64x32xf32>
    %28 = arith.addf %21, %27 : vector<64x32xf32>
    %c0_28 = arith.constant 0 : index
    %c1_29 = arith.constant 1 : index
    %c1_30 = arith.constant 1 : index
    %c0_31 = arith.constant 0 : index
    %29 = vector.load %arg2[%c0_28, %c1_29, %c1_30, %c0_31] : memref<1x10x10x16xf32, #tpu.memory_space<vmem>>, vector<1x8x8x16xf32>
    %30 = vector.shape_cast %29 : vector<1x8x8x16xf32> to vector<64x16xf32>
    %31 = arith.truncf %30 : vector<64x16xf32> to vector<64x16xbf16>
    %c4 = arith.constant 4 : index
    %c0_32 = arith.constant 0 : index
    %c0_33 = arith.constant 0 : index
    %32 = vector.load %arg3[%c4, %c0_32, %c0_33] : memref<9x16x32xbf16, #tpu.memory_space<vmem>>, vector<1x16x32xbf16>
    %33 = vector.shape_cast %32 : vector<1x16x32xbf16> to vector<16x32xbf16>
    %cst_34 = arith.constant dense<0.000000e+00> : vector<64x32xf32>
    %34 = tpu.matmul %31, %33, %cst_34 {dimension_numbers = #tpu.dot_dimension_numbers<[1], [0], [0], [1], [0, 0, 1, 1], [], []>} : vector<64x16xbf16>, vector<16x32xbf16>, vector<64x32xf32> -> vector<64x32xf32>
    %35 = arith.addf %28, %34 : vector<64x32xf32>
    %c0_35 = arith.constant 0 : index
    %c1_36 = arith.constant 1 : index
    %c2_37 = arith.constant 2 : index
    %c0_38 = arith.constant 0 : index
    %36 = vector.load %arg2[%c0_35, %c1_36, %c2_37, %c0_38] : memref<1x10x10x16xf32, #tpu.memory_space<vmem>>, vector<1x8x8x16xf32>
    %37 = vector.shape_cast %36 : vector<1x8x8x16xf32> to vector<64x16xf32>
    %38 = arith.truncf %37 : vector<64x16xf32> to vector<64x16xbf16>
    %c5 = arith.constant 5 : index
    %c0_39 = arith.constant 0 : index
    %c0_40 = arith.constant 0 : index
    %39 = vector.load %arg3[%c5, %c0_39, %c0_40] : memref<9x16x32xbf16, #tpu.memory_space<vmem>>, vector<1x16x32xbf16>
    %40 = vector.shape_cast %39 : vector<1x16x32xbf16> to vector<16x32xbf16>
    %cst_41 = arith.constant dense<0.000000e+00> : vector<64x32xf32>
    %41 = tpu.matmul %38, %40, %cst_41 {dimension_numbers = #tpu.dot_dimension_numbers<[1], [0], [0], [1], [0, 0, 1, 1], [], []>} : vector<64x16xbf16>, vector<16x32xbf16>, vector<64x32xf32> -> vector<64x32xf32>
    %42 = arith.addf %35, %41 : vector<64x32xf32>
    %c0_42 = arith.constant 0 : index
    %c2_43 = arith.constant 2 : index
    %c0_44 = arith.constant 0 : index
    %c0_45 = arith.constant 0 : index
    %43 = vector.load %arg2[%c0_42, %c2_43, %c0_44, %c0_45] : memref<1x10x10x16xf32, #tpu.memory_space<vmem>>, vector<1x8x8x16xf32>
    %44 = vector.shape_cast %43 : vector<1x8x8x16xf32> to vector<64x16xf32>
    %45 = arith.truncf %44 : vector<64x16xf32> to vector<64x16xbf16>
    %c6 = arith.constant 6 : index
    %c0_46 = arith.constant 0 : index
    %c0_47 = arith.constant 0 : index
    %46 = vector.load %arg3[%c6, %c0_46, %c0_47] : memref<9x16x32xbf16, #tpu.memory_space<vmem>>, vector<1x16x32xbf16>
    %47 = vector.shape_cast %46 : vector<1x16x32xbf16> to vector<16x32xbf16>
    %cst_48 = arith.constant dense<0.000000e+00> : vector<64x32xf32>
    %48 = tpu.matmul %45, %47, %cst_48 {dimension_numbers = #tpu.dot_dimension_numbers<[1], [0], [0], [1], [0, 0, 1, 1], [], []>} : vector<64x16xbf16>, vector<16x32xbf16>, vector<64x32xf32> -> vector<64x32xf32>
    %49 = arith.addf %42, %48 : vector<64x32xf32>
    %c0_49 = arith.constant 0 : index
    %c2_50 = arith.constant 2 : index
    %c1_51 = arith.constant 1 : index
    %c0_52 = arith.constant 0 : index
    %50 = vector.load %arg2[%c0_49, %c2_50, %c1_51, %c0_52] : memref<1x10x10x16xf32, #tpu.memory_space<vmem>>, vector<1x8x8x16xf32>
    %51 = vector.shape_cast %50 : vector<1x8x8x16xf32> to vector<64x16xf32>
    %52 = arith.truncf %51 : vector<64x16xf32> to vector<64x16xbf16>
    %c7 = arith.constant 7 : index
    %c0_53 = arith.constant 0 : index
    %c0_54 = arith.constant 0 : index
    %53 = vector.load %arg3[%c7, %c0_53, %c0_54] : memref<9x16x32xbf16, #tpu.memory_space<vmem>>, vector<1x16x32xbf16>
    %54 = vector.shape_cast %53 : vector<1x16x32xbf16> to vector<16x32xbf16>
    %cst_55 = arith.constant dense<0.000000e+00> : vector<64x32xf32>
    %55 = tpu.matmul %52, %54, %cst_55 {dimension_numbers = #tpu.dot_dimension_numbers<[1], [0], [0], [1], [0, 0, 1, 1], [], []>} : vector<64x16xbf16>, vector<16x32xbf16>, vector<64x32xf32> -> vector<64x32xf32>
    %56 = arith.addf %49, %55 : vector<64x32xf32>
    %c0_56 = arith.constant 0 : index
    %c2_57 = arith.constant 2 : index
    %c2_58 = arith.constant 2 : index
    %c0_59 = arith.constant 0 : index
    %57 = vector.load %arg2[%c0_56, %c2_57, %c2_58, %c0_59] : memref<1x10x10x16xf32, #tpu.memory_space<vmem>>, vector<1x8x8x16xf32>
    %58 = vector.shape_cast %57 : vector<1x8x8x16xf32> to vector<64x16xf32>
    %59 = arith.truncf %58 : vector<64x16xf32> to vector<64x16xbf16>
    %c8 = arith.constant 8 : index
    %c0_60 = arith.constant 0 : index
    %c0_61 = arith.constant 0 : index
    %60 = vector.load %arg3[%c8, %c0_60, %c0_61] : memref<9x16x32xbf16, #tpu.memory_space<vmem>>, vector<1x16x32xbf16>
    %61 = vector.shape_cast %60 : vector<1x16x32xbf16> to vector<16x32xbf16>
    %cst_62 = arith.constant dense<0.000000e+00> : vector<64x32xf32>
    %62 = tpu.matmul %59, %61, %cst_62 {dimension_numbers = #tpu.dot_dimension_numbers<[1], [0], [0], [1], [0, 0, 1, 1], [], []>} : vector<64x16xbf16>, vector<16x32xbf16>, vector<64x32xf32> -> vector<64x32xf32>
    %63 = arith.addf %56, %62 : vector<64x32xf32>
    %c0_63 = arith.constant 0 : index
    %c0_64 = arith.constant 0 : index
    %64 = vector.load %arg4[%c0_63, %c0_64] : memref<1x32xf32, #tpu.memory_space<vmem>>, vector<1x32xf32>
    %65 = vector.broadcast %64 : vector<1x32xf32> to vector<64x32xf32>
    %66 = arith.addf %63, %65 : vector<64x32xf32>
    %cst_65 = arith.constant 0.000000e+00 : f32
    %67 = vector.broadcast %cst_65 : f32 to vector<64x32xf32>
    %68 = arith.maximumf %66, %67 : vector<64x32xf32>
    %cst_66 = arith.constant 0.000000e+00 : f32
    %69 = vector.broadcast %cst_66 : f32 to vector<1x1x10x32xf32>
    %cst_67 = arith.constant 0.000000e+00 : f32
    %70 = vector.broadcast %cst_67 : f32 to vector<1x10x1x32xf32>
    %c0_68 = arith.constant 0 : index
    %c0_69 = arith.constant 0 : index
    %c0_70 = arith.constant 0 : index
    %c0_71 = arith.constant 0 : index
    %71 = vector.load %arg9[%c0_68, %c0_69, %c0_70, %c0_71] : memref<1x10x10x32xf32, #tpu.memory_space<vmem>>, vector<1x1x10x32xf32>
    tpu.vector_store %arg9[%c0_68, %c0_69, %c0_70, %c0_71], %69 {strides = array<i32>} : memref<1x10x10x32xf32, #tpu.memory_space<vmem>>, vector<1x1x10x32xf32>,
    %c0_72 = arith.constant 0 : index
    %c9 = arith.constant 9 : index
    %c0_73 = arith.constant 0 : index
    %c0_74 = arith.constant 0 : index
    %72 = vector.load %arg9[%c0_72, %c9, %c0_73, %c0_74] : memref<1x10x10x32xf32, #tpu.memory_space<vmem>>, vector<1x1x10x32xf32>
    tpu.vector_store %arg9[%c0_72, %c9, %c0_73, %c0_74], %69 {strides = array<i32>} : memref<1x10x10x32xf32, #tpu.memory_space<vmem>>, vector<1x1x10x32xf32>,
    %c0_75 = arith.constant 0 : index
    %c0_76 = arith.constant 0 : index
    %c0_77 = arith.constant 0 : index
    %c0_78 = arith.constant 0 : index
    %73 = vector.load %arg9[%c0_75, %c0_76, %c0_77, %c0_78] : memref<1x10x10x32xf32, #tpu.memory_space<vmem>>, vector<1x10x1x32xf32>
    tpu.vector_store %arg9[%c0_75, %c0_76, %c0_77, %c0_78], %70 {strides = array<i32>} : memref<1x10x10x32xf32, #tpu.memory_space<vmem>>, vector<1x10x1x32xf32>,
    %c0_79 = arith.constant 0 : index
    %c0_80 = arith.constant 0 : index
    %c9_81 = arith.constant 9 : index
    %c0_82 = arith.constant 0 : index
    %74 = vector.load %arg9[%c0_79, %c0_80, %c9_81, %c0_82] : memref<1x10x10x32xf32, #tpu.memory_space<vmem>>, vector<1x10x1x32xf32>
    tpu.vector_store %arg9[%c0_79, %c0_80, %c9_81, %c0_82], %70 {strides = array<i32>} : memref<1x10x10x32xf32, #tpu.memory_space<vmem>>, vector<1x10x1x32xf32>,
    %75 = vector.shape_cast %68 : vector<64x32xf32> to vector<1x8x8x32xf32>
    %c0_83 = arith.constant 0 : index
    %c1_84 = arith.constant 1 : index
    %c1_85 = arith.constant 1 : index
    %c0_86 = arith.constant 0 : index
    %76 = vector.load %arg9[%c0_83, %c1_84, %c1_85, %c0_86] : memref<1x10x10x32xf32, #tpu.memory_space<vmem>>, vector<1x8x8x32xf32>
    tpu.vector_store %arg9[%c0_83, %c1_84, %c1_85, %c0_86], %75 {strides = array<i32>} : memref<1x10x10x32xf32, #tpu.memory_space<vmem>>, vector<1x8x8x32xf32>,
    %cst_87 = arith.constant 0.000000e+00 : f32
    %77 = vector.broadcast %cst_87 : f32 to vector<64x9xf32>
    %c0_88 = arith.constant 0 : index
    %c0_89 = arith.constant 0 : index
    %c0_90 = arith.constant 0 : index
    %c0_91 = arith.constant 0 : index
    %78 = vector.load %arg9[%c0_88, %c0_89, %c0_90, %c0_91] : memref<1x10x10x32xf32, #tpu.memory_space<vmem>>, vector<1x8x8x32xf32>
    %79 = vector.shape_cast %78 : vector<1x8x8x32xf32> to vector<64x32xf32>
    %80 = arith.truncf %79 : vector<64x32xf32> to vector<64x32xbf16>
    %c0_92 = arith.constant 0 : index
    %c0_93 = arith.constant 0 : index
    %c0_94 = arith.constant 0 : index
    %81 = vector.load %arg5[%c0_92, %c0_93, %c0_94] : memref<9x32x9xbf16, #tpu.memory_space<vmem>>, vector<1x32x9xbf16>
    %82 = vector.shape_cast %81 : vector<1x32x9xbf16> to vector<32x9xbf16>
    %cst_95 = arith.constant dense<0.000000e+00> : vector<64x9xf32>
    %83 = tpu.matmul %80, %82, %cst_95 {dimension_numbers = #tpu.dot_dimension_numbers<[1], [0], [0], [1], [0, 0, 1, 1], [], []>} : vector<64x32xbf16>, vector<32x9xbf16>, vector<64x9xf32> -> vector<64x9xf32>
    %84 = arith.addf %77, %83 : vector<64x9xf32>
    %c0_96 = arith.constant 0 : index
    %c0_97 = arith.constant 0 : index
    %c1_98 = arith.constant 1 : index
    %c0_99 = arith.constant 0 : index
    %85 = vector.load %arg9[%c0_96, %c0_97, %c1_98, %c0_99] : memref<1x10x10x32xf32, #tpu.memory_space<vmem>>, vector<1x8x8x32xf32>
    %86 = vector.shape_cast %85 : vector<1x8x8x32xf32> to vector<64x32xf32>
    %87 = arith.truncf %86 : vector<64x32xf32> to vector<64x32xbf16>
    %c1_100 = arith.constant 1 : index
    %c0_101 = arith.constant 0 : index
    %c0_102 = arith.constant 0 : index
    %88 = vector.load %arg5[%c1_100, %c0_101, %c0_102] : memref<9x32x9xbf16, #tpu.memory_space<vmem>>, vector<1x32x9xbf16>
    %89 = vector.shape_cast %88 : vector<1x32x9xbf16> to vector<32x9xbf16>
    %cst_103 = arith.constant dense<0.000000e+00> : vector<64x9xf32>
    %90 = tpu.matmul %87, %89, %cst_103 {dimension_numbers = #tpu.dot_dimension_numbers<[1], [0], [0], [1], [0, 0, 1, 1], [], []>} : vector<64x32xbf16>, vector<32x9xbf16>, vector<64x9xf32> -> vector<64x9xf32>
    %91 = arith.addf %84, %90 : vector<64x9xf32>
    %c0_104 = arith.constant 0 : index
    %c0_105 = arith.constant 0 : index
    %c2_106 = arith.constant 2 : index
    %c0_107 = arith.constant 0 : index
    %92 = vector.load %arg9[%c0_104, %c0_105, %c2_106, %c0_107] : memref<1x10x10x32xf32, #tpu.memory_space<vmem>>, vector<1x8x8x32xf32>
    %93 = vector.shape_cast %92 : vector<1x8x8x32xf32> to vector<64x32xf32>
    %94 = arith.truncf %93 : vector<64x32xf32> to vector<64x32xbf16>
    %c2_108 = arith.constant 2 : index
    %c0_109 = arith.constant 0 : index
    %c0_110 = arith.constant 0 : index
    %95 = vector.load %arg5[%c2_108, %c0_109, %c0_110] : memref<9x32x9xbf16, #tpu.memory_space<vmem>>, vector<1x32x9xbf16>
    %96 = vector.shape_cast %95 : vector<1x32x9xbf16> to vector<32x9xbf16>
    %cst_111 = arith.constant dense<0.000000e+00> : vector<64x9xf32>
    %97 = tpu.matmul %94, %96, %cst_111 {dimension_numbers = #tpu.dot_dimension_numbers<[1], [0], [0], [1], [0, 0, 1, 1], [], []>} : vector<64x32xbf16>, vector<32x9xbf16>, vector<64x9xf32> -> vector<64x9xf32>
    %98 = arith.addf %91, %97 : vector<64x9xf32>
    %c0_112 = arith.constant 0 : index
    %c1_113 = arith.constant 1 : index
    %c0_114 = arith.constant 0 : index
    %c0_115 = arith.constant 0 : index
    %99 = vector.load %arg9[%c0_112, %c1_113, %c0_114, %c0_115] : memref<1x10x10x32xf32, #tpu.memory_space<vmem>>, vector<1x8x8x32xf32>
    %100 = vector.shape_cast %99 : vector<1x8x8x32xf32> to vector<64x32xf32>
    %101 = arith.truncf %100 : vector<64x32xf32> to vector<64x32xbf16>
    %c3_116 = arith.constant 3 : index
    %c0_117 = arith.constant 0 : index
    %c0_118 = arith.constant 0 : index
    %102 = vector.load %arg5[%c3_116, %c0_117, %c0_118] : memref<9x32x9xbf16, #tpu.memory_space<vmem>>, vector<1x32x9xbf16>
    %103 = vector.shape_cast %102 : vector<1x32x9xbf16> to vector<32x9xbf16>
    %cst_119 = arith.constant dense<0.000000e+00> : vector<64x9xf32>
    %104 = tpu.matmul %101, %103, %cst_119 {dimension_numbers = #tpu.dot_dimension_numbers<[1], [0], [0], [1], [0, 0, 1, 1], [], []>} : vector<64x32xbf16>, vector<32x9xbf16>, vector<64x9xf32> -> vector<64x9xf32>
    %105 = arith.addf %98, %104 : vector<64x9xf32>
    %c0_120 = arith.constant 0 : index
    %c1_121 = arith.constant 1 : index
    %c1_122 = arith.constant 1 : index
    %c0_123 = arith.constant 0 : index
    %106 = vector.load %arg9[%c0_120, %c1_121, %c1_122, %c0_123] : memref<1x10x10x32xf32, #tpu.memory_space<vmem>>, vector<1x8x8x32xf32>
    %107 = vector.shape_cast %106 : vector<1x8x8x32xf32> to vector<64x32xf32>
    %108 = arith.truncf %107 : vector<64x32xf32> to vector<64x32xbf16>
    %c4_124 = arith.constant 4 : index
    %c0_125 = arith.constant 0 : index
    %c0_126 = arith.constant 0 : index
    %109 = vector.load %arg5[%c4_124, %c0_125, %c0_126] : memref<9x32x9xbf16, #tpu.memory_space<vmem>>, vector<1x32x9xbf16>
    %110 = vector.shape_cast %109 : vector<1x32x9xbf16> to vector<32x9xbf16>
    %cst_127 = arith.constant dense<0.000000e+00> : vector<64x9xf32>
    %111 = tpu.matmul %108, %110, %cst_127 {dimension_numbers = #tpu.dot_dimension_numbers<[1], [0], [0], [1], [0, 0, 1, 1], [], []>} : vector<64x32xbf16>, vector<32x9xbf16>, vector<64x9xf32> -> vector<64x9xf32>
    %112 = arith.addf %105, %111 : vector<64x9xf32>
    %c0_128 = arith.constant 0 : index
    %c1_129 = arith.constant 1 : index
    %c2_130 = arith.constant 2 : index
    %c0_131 = arith.constant 0 : index
    %113 = vector.load %arg9[%c0_128, %c1_129, %c2_130, %c0_131] : memref<1x10x10x32xf32, #tpu.memory_space<vmem>>, vector<1x8x8x32xf32>
    %114 = vector.shape_cast %113 : vector<1x8x8x32xf32> to vector<64x32xf32>
    %115 = arith.truncf %114 : vector<64x32xf32> to vector<64x32xbf16>
    %c5_132 = arith.constant 5 : index
    %c0_133 = arith.constant 0 : index
    %c0_134 = arith.constant 0 : index
    %116 = vector.load %arg5[%c5_132, %c0_133, %c0_134] : memref<9x32x9xbf16, #tpu.memory_space<vmem>>, vector<1x32x9xbf16>
    %117 = vector.shape_cast %116 : vector<1x32x9xbf16> to vector<32x9xbf16>
    %cst_135 = arith.constant dense<0.000000e+00> : vector<64x9xf32>
    %118 = tpu.matmul %115, %117, %cst_135 {dimension_numbers = #tpu.dot_dimension_numbers<[1], [0], [0], [1], [0, 0, 1, 1], [], []>} : vector<64x32xbf16>, vector<32x9xbf16>, vector<64x9xf32> -> vector<64x9xf32>
    %119 = arith.addf %112, %118 : vector<64x9xf32>
    %c0_136 = arith.constant 0 : index
    %c2_137 = arith.constant 2 : index
    %c0_138 = arith.constant 0 : index
    %c0_139 = arith.constant 0 : index
    %120 = vector.load %arg9[%c0_136, %c2_137, %c0_138, %c0_139] : memref<1x10x10x32xf32, #tpu.memory_space<vmem>>, vector<1x8x8x32xf32>
    %121 = vector.shape_cast %120 : vector<1x8x8x32xf32> to vector<64x32xf32>
    %122 = arith.truncf %121 : vector<64x32xf32> to vector<64x32xbf16>
    %c6_140 = arith.constant 6 : index
    %c0_141 = arith.constant 0 : index
    %c0_142 = arith.constant 0 : index
    %123 = vector.load %arg5[%c6_140, %c0_141, %c0_142] : memref<9x32x9xbf16, #tpu.memory_space<vmem>>, vector<1x32x9xbf16>
    %124 = vector.shape_cast %123 : vector<1x32x9xbf16> to vector<32x9xbf16>
    %cst_143 = arith.constant dense<0.000000e+00> : vector<64x9xf32>
    %125 = tpu.matmul %122, %124, %cst_143 {dimension_numbers = #tpu.dot_dimension_numbers<[1], [0], [0], [1], [0, 0, 1, 1], [], []>} : vector<64x32xbf16>, vector<32x9xbf16>, vector<64x9xf32> -> vector<64x9xf32>
    %126 = arith.addf %119, %125 : vector<64x9xf32>
    %c0_144 = arith.constant 0 : index
    %c2_145 = arith.constant 2 : index
    %c1_146 = arith.constant 1 : index
    %c0_147 = arith.constant 0 : index
    %127 = vector.load %arg9[%c0_144, %c2_145, %c1_146, %c0_147] : memref<1x10x10x32xf32, #tpu.memory_space<vmem>>, vector<1x8x8x32xf32>
    %128 = vector.shape_cast %127 : vector<1x8x8x32xf32> to vector<64x32xf32>
    %129 = arith.truncf %128 : vector<64x32xf32> to vector<64x32xbf16>
    %c7_148 = arith.constant 7 : index
    %c0_149 = arith.constant 0 : index
    %c0_150 = arith.constant 0 : index
    %130 = vector.load %arg5[%c7_148, %c0_149, %c0_150] : memref<9x32x9xbf16, #tpu.memory_space<vmem>>, vector<1x32x9xbf16>
    %131 = vector.shape_cast %130 : vector<1x32x9xbf16> to vector<32x9xbf16>
    %cst_151 = arith.constant dense<0.000000e+00> : vector<64x9xf32>
    %132 = tpu.matmul %129, %131, %cst_151 {dimension_numbers = #tpu.dot_dimension_numbers<[1], [0], [0], [1], [0, 0, 1, 1], [], []>} : vector<64x32xbf16>, vector<32x9xbf16>, vector<64x9xf32> -> vector<64x9xf32>
    %133 = arith.addf %126, %132 : vector<64x9xf32>
    %c0_152 = arith.constant 0 : index
    %c2_153 = arith.constant 2 : index
    %c2_154 = arith.constant 2 : index
    %c0_155 = arith.constant 0 : index
    %134 = vector.load %arg9[%c0_152, %c2_153, %c2_154, %c0_155] : memref<1x10x10x32xf32, #tpu.memory_space<vmem>>, vector<1x8x8x32xf32>
    %135 = vector.shape_cast %134 : vector<1x8x8x32xf32> to vector<64x32xf32>
    %136 = arith.truncf %135 : vector<64x32xf32> to vector<64x32xbf16>
    %c8_156 = arith.constant 8 : index
    %c0_157 = arith.constant 0 : index
    %c0_158 = arith.constant 0 : index
    %137 = vector.load %arg5[%c8_156, %c0_157, %c0_158] : memref<9x32x9xbf16, #tpu.memory_space<vmem>>, vector<1x32x9xbf16>
    %138 = vector.shape_cast %137 : vector<1x32x9xbf16> to vector<32x9xbf16>
    %cst_159 = arith.constant dense<0.000000e+00> : vector<64x9xf32>
    %139 = tpu.matmul %136, %138, %cst_159 {dimension_numbers = #tpu.dot_dimension_numbers<[1], [0], [0], [1], [0, 0, 1, 1], [], []>} : vector<64x32xbf16>, vector<32x9xbf16>, vector<64x9xf32> -> vector<64x9xf32>
    %140 = arith.addf %133, %139 : vector<64x9xf32>
    %c0_160 = arith.constant 0 : index
    %c0_161 = arith.constant 0 : index
    %141 = vector.load %arg6[%c0_160, %c0_161] : memref<1x9xf32, #tpu.memory_space<vmem>>, vector<1x9xf32>
    %142 = vector.broadcast %141 : vector<1x9xf32> to vector<64x9xf32>
    %143 = arith.addf %140, %142 : vector<64x9xf32>
    %144 = vector.extract_strided_slice %143 {offsets = [0, 0], sizes = [64, 1], strides = [1, 1]} : vector<64x9xf32> to vector<64x1xf32>
    %145 = arith.negf %144 : vector<64x1xf32>
    %146 = math.exp %145 : vector<64x1xf32>
    %cst_162 = arith.constant 1.000000e+00 : f32
    %147 = vector.broadcast %cst_162 : f32 to vector<64x1xf32>
    %148 = arith.addf %147, %146 : vector<64x1xf32>
    %149 = arith.divf %147, %148 : vector<64x1xf32>
    %150 = vector.extract_strided_slice %143 {offsets = [0, 1], sizes = [64, 8], strides = [1, 1]} : vector<64x9xf32> to vector<64x8xf32>
    %c0_163 = arith.constant 0 : index
    %c0_164 = arith.constant 0 : index
    %c0_165 = arith.constant 0 : index
    %151 = vector.load %arg1[%c0_163, %c0_164, %c0_165] : memref<1x64x8xf32, #tpu.memory_space<vmem>>, vector<1x64x8xf32>
    %152 = vector.shape_cast %151 : vector<1x64x8xf32> to vector<64x8xf32>
    %c0_166 = arith.constant 0 : index
    %c0_167 = arith.constant 0 : index
    %153 = memref.load %arg7[%c0_166, %c0_167] : memref<1x1xf32, #tpu.memory_space<smem>>
    %154 = vector.broadcast %149 : vector<64x1xf32> to vector<64x8xf32>
    %155 = arith.mulf %154, %152 : vector<64x8xf32>
    %156 = vector.broadcast %153 : f32 to vector<64x8xf32>
    %157 = arith.mulf %156, %155 : vector<64x8xf32>
    %158 = arith.addf %157, %150 : vector<64x8xf32>
    %159 = tpu.concatenate %158, %149 in 1 : vector<64x8xf32>, vector<64x1xf32> -> vector<64x9xf32>
    %160 = vector.shape_cast %159 : vector<64x9xf32> to vector<1x64x9xf32>
    %c0_168 = arith.constant 0 : index
    %c0_169 = arith.constant 0 : index
    %c0_170 = arith.constant 0 : index
    %161 = vector.load %arg8[%c0_168, %c0_169, %c0_170] : memref<1x64x9xf32, #tpu.memory_space<vmem>>, vector<1x64x9xf32>
    tpu.vector_store %arg8[%c0_168, %c0_169, %c0_170], %160 {strides = array<i32>} : memref<1x64x9xf32, #tpu.memory_space<vmem>>, vector<1x64x9xf32>,
    return
  }
  func.func @transform_0(%arg0: i32) -> (i32, i32, i32) {
    %c0_i32 = arith.constant 0 : i32
    %c0_i32_0 = arith.constant 0 : i32
    %c0_i32_1 = arith.constant 0 : i32
    return %arg0, %c0_i32, %c0_i32_0 : i32, i32, i32
  }
  func.func @transform_1(%arg0: i32) -> (i32, i32, i32, i32) {
    %c0_i32 = arith.constant 0 : i32
    %c0_i32_0 = arith.constant 0 : i32
    %c0_i32_1 = arith.constant 0 : i32
    %c0_i32_2 = arith.constant 0 : i32
    return %arg0, %c0_i32, %c0_i32_0, %c0_i32_1 : i32, i32, i32, i32
  }
  func.func @transform_2(%arg0: i32) -> (i32, i32, i32) {
    %c0_i32 = arith.constant 0 : i32
    %c0_i32_0 = arith.constant 0 : i32
    %c0_i32_1 = arith.constant 0 : i32
    %c0_i32_2 = arith.constant 0 : i32
    return %c0_i32, %c0_i32_0, %c0_i32_1 : i32, i32, i32
  }
  func.func @transform_3(%arg0: i32) -> (i32, i32) {
    %c0_i32 = arith.constant 0 : i32
    %c0_i32_0 = arith.constant 0 : i32
    %c0_i32_1 = arith.constant 0 : i32
    return %c0_i32, %c0_i32_0 : i32, i32
  }
  func.func @transform_4(%arg0: i32) -> (i32, i32, i32) {
    %c0_i32 = arith.constant 0 : i32
    %c0_i32_0 = arith.constant 0 : i32
    %c0_i32_1 = arith.constant 0 : i32
    %c0_i32_2 = arith.constant 0 : i32
    return %c0_i32, %c0_i32_0, %c0_i32_1 : i32, i32, i32
  }
  func.func @transform_5(%arg0: i32) -> (i32, i32) {
    %c0_i32 = arith.constant 0 : i32
    %c0_i32_0 = arith.constant 0 : i32
    %c0_i32_1 = arith.constant 0 : i32
    return %c0_i32, %c0_i32_0 : i32, i32
  }
  func.func @transform_6(%arg0: i32) -> (i32, i32) {
    %c0_i32 = arith.constant 0 : i32
    %c0_i32_0 = arith.constant 0 : i32
    %c0_i32_1 = arith.constant 0 : i32
    return %c0_i32, %c0_i32_0 : i32, i32
  }
  func.func @transform_7(%arg0: i32) -> (i32, i32, i32) {
    %c0_i32 = arith.constant 0 : i32
    %c0_i32_0 = arith.constant 0 : i32
    %c0_i32_1 = arith.constant 0 : i32
    return %arg0, %c0_i32, %c0_i32_0 : i32, i32, i32
  }
}

</mosaic_0001>

<llo_original>
// kernel: tpu_custom_call.1
$region0: #{tpu_custom_call.1}
  #allocation0 [shape = 'u32[]', space=smem, size = 0x4, offset = 0x4, fixed_abs, tag = 'smem constant byte address 0x4 - core index']
  #allocation1 [shape = 'u32[144,128]{1,0:T(1,128)}', space=vmem, size = 0x12000, scoped, tag = 'internal scratch']
  #allocation2 [shape = 'f32[1,10,10,32]{3,2,1,0:T(8,128)}', space=vmem, size = 0x14000, scoped, tag = 'scratch operand']
  #allocation3 [shape = 'f32[1,1]{1,0:T(1,128)S(6)}', space=smem, size = 0x200, scoped, tag = 'scoped memory for tpu_custom_call.1']
  %s0 = inlined_call_operand.vmem [shape: f32[2,64,8], index: 0, kind: input, shape index: {}]
  %s1 = inlined_call_operand.vmem [shape: f32[2,10,10,16], index: 1, kind: input, shape index: {}]
  %s2 = inlined_call_operand.vmem [shape: bf16[9,16,32], index: 2, kind: input, shape index: {}]
  %s3 = inlined_call_operand.vmem [shape: f32[1,32], index: 3, kind: input, shape index: {}]
  %s4 = inlined_call_operand.vmem [shape: bf16[9,32,9], index: 4, kind: input, shape index: {}]
  %s5 = inlined_call_operand.vmem [shape: f32[1,9], index: 5, kind: input, shape index: {}]
  %s6 = inlined_call_operand.<no memory space> [shape: f32[1,1], index: 6, kind: input, shape index: {}]
  %s7 = inlined_call_operand.vmem [shape: f32[2,64,9], index: 7, kind: output, shape index: {}]
  %s8 = sld [smem:[#allocation0]]
  $region61: #{tpu_custom_call.1} parent=0
    _
  %s10 = ssub.s32 1, %s8
  %s11 = scalar_select 0, %s10, %s8
  %12 = sst [smem:[#allocation3]] %s6
  loop: start=0, step=1, limit=4
  $region2: #{tpu_custom_call.1} parent=0 // loop_pre_header
    _
  $region3: #{tpu_custom_call.1} parent=0 // loop_header
    %s14 = sphi 0, %s18
    %p15 = scmp.ge.s32.totalorder %s14, 4
    %s24 = sphi 0, %s26
    %s27 = sphi 0, %s24
    %s28 = sphi 0, %s27
    %s44 = sphi 0, %s28
    %s50 = sphi 0, %s52
    %s53 = sphi 0, %s50
    %s54 = sphi 0, %s53
    %s70 = sphi 0, %s54
    %s74 = sphi 0, %s74
    %s76 = sphi 0, %s74
    %s77 = sphi 0, %s76
    %s91 = sphi 0, %s77
    %s95 = sphi 0, %s95
    %s97 = sphi 0, %s95
    %s98 = sphi 0, %s97
    %s112 = sphi 0, %s98
    %s116 = sphi 0, %s116
    %s118 = sphi 0, %s116
    %s119 = sphi 0, %s118
    %s133 = sphi 0, %s119
    %s137 = sphi 0, %s137
    %s139 = sphi 0, %s137
    %s140 = sphi 0, %s139
    %s154 = sphi 0, %s140
    %s158 = sphi 0, %s158
    %s160 = sphi 0, %s158
    %s161 = sphi 0, %s160
    %s175 = sphi 0, %s161
    %s181 = sphi 0, %s183
    %s184 = sphi 0, %s181
    %s185 = sphi 0, %s184
    %s201 = sphi 0, %s185
  $region4: #{tpu_custom_call.1} parent=0 // loop_header_branch
    %17 = sbr.rel (%p15) target = $region8
  $region5: #{tpu_custom_call.1} parent=0 // loop_body
    %s19 = ssub.s32 %s14, 1
    %s20 = ssub.s32 %s14, 2
    %s21 = sadd.s32 %s14, 1
    %s22 = ssub.s32 %s14, %s21
    %p23 = scmp.eq.s32.totalorder %s22, 0
    %s25 = sadd.s32 %s24, 1
    %s26 = scalar_select %p23, %s24, %s25
    %p29 = pneg %p23
    %p30 = scmp.eq.s32.totalorder %s14, 1
    %p31 = por %p29, %p30
    %p32 = scmp.ne.s32.totalorder %s24, %s27
    %p33 = scmp.eq.s32.totalorder %s14, 0
    %p34 = por %p32, %p33
    %p35 = scmp.ne.s32.totalorder %s24, %s27
    %p36 = scmp.eq.s32.totalorder %s19, 1
    %p37 = por %p35, %p36
    %p38 = scmp.ne.s32.totalorder %s27, %s28
    %p39 = scmp.eq.s32.totalorder %s19, 0
    %p40 = por %p38, %p39
    %p41 = scmp.ne.s32.totalorder %s27, %s28
    %p42 = scmp.eq.s32.totalorder %s20, 1
    %p43 = por %p41, %p42
    %p45 = scmp.ne.s32.totalorder %s28, %s44
    %p46 = scmp.eq.s32.totalorder %s20, 0
    %p47 = por %p45, %p46
    %s48 = ssub.s32 %s14, %s21
    %p49 = scmp.eq.s32.totalorder %s48, 0
    %s51 = sadd.s32 %s50, 1
    %s52 = scalar_select %p49, %s50, %s51
    %p55 = pneg %p49
    %p56 = scmp.eq.s32.totalorder %s14, 1
    %p57 = por %p55, %p56
    %p58 = scmp.ne.s32.totalorder %s50, %s53
    %p59 = scmp.eq.s32.totalorder %s14, 0
    %p60 = por %p58, %p59
    %p61 = scmp.ne.s32.totalorder %s50, %s53
    %p62 = scmp.eq.s32.totalorder %s19, 1
    %p63 = por %p61, %p62
    %p64 = scmp.ne.s32.totalorder %s53, %s54
    %p65 = scmp.eq.s32.totalorder %s19, 0
    %p66 = por %p64, %p65
    %p67 = scmp.ne.s32.totalorder %s53, %s54
    %p68 = scmp.eq.s32.totalorder %s20, 1
    %p69 = por %p67, %p68
    %p71 = scmp.ne.s32.totalorder %s54, %s70
    %p72 = scmp.eq.s32.totalorder %s20, 0
    %p73 = por %p71, %p72
    %s75 = sadd.s32 %s74, 1
    %p78 = scmp.eq.s32.totalorder %s14, 1
    %p79 = scmp.ne.s32.totalorder %s74, %s76
    %p80 = scmp.eq.s32.totalorder %s14, 0
    %p81 = por %p79, %p80
    %p82 = scmp.ne.s32.totalorder %s74, %s76
    %p83 = scmp.eq.s32.totalorder %s19, 1
    %p84 = por %p82, %p83
    %p85 = scmp.ne.s32.totalorder %s76, %s77
    %p86 = scmp.eq.s32.totalorder %s19, 0
    %p87 = por %p85, %p86
    %p88 = scmp.ne.s32.totalorder %s76, %s77
    %p89 = scmp.eq.s32.totalorder %s20, 1
    %p90 = por %p88, %p89
    %p92 = scmp.ne.s32.totalorder %s77, %s91
    %p93 = scmp.eq.s32.totalorder %s20, 0
    %p94 = por %p92, %p93
    %s96 = sadd.s32 %s95, 1
    %p99 = scmp.eq.s32.totalorder %s14, 1
    %p100 = scmp.ne.s32.totalorder %s95, %s97
    %p101 = scmp.eq.s32.totalorder %s14, 0
    %p102 = por %p100, %p101
    %p103 = scmp.ne.s32.totalorder %s95, %s97
    %p104 = scmp.eq.s32.totalorder %s19, 1
    %p105 = por %p103, %p104
    %p106 = scmp.ne.s32.totalorder %s97, %s98
    %p107 = scmp.eq.s32.totalorder %s19, 0
    %p108 = por %p106, %p107
    %p109 = scmp.ne.s32.totalorder %s97, %s98
    %p110 = scmp.eq.s32.totalorder %s20, 1
    %p111 = por %p109, %p110
    %p113 = scmp.ne.s32.totalorder %s98, %s112
    %p114 = scmp.eq.s32.totalorder %s20, 0
    %p115 = por %p113, %p114
    %s117 = sadd.s32 %s116, 1
    %p120 = scmp.eq.s32.totalorder %s14, 1
    %p121 = scmp.ne.s32.totalorder %s116, %s118
    %p122 = scmp.eq.s32.totalorder %s14, 0
    %p123 = por %p121, %p122
    %p124 = scmp.ne.s32.totalorder %s116, %s118
    %p125 = scmp.eq.s32.totalorder %s19, 1
    %p126 = por %p124, %p125
    %p127 = scmp.ne.s32.totalorder %s118, %s119
    %p128 = scmp.eq.s32.totalorder %s19, 0
    %p129 = por %p127, %p128
    %p130 = scmp.ne.s32.totalorder %s118, %s119
    %p131 = scmp.eq.s32.totalorder %s20, 1
    %p132 = por %p130, %p131
    %p134 = scmp.ne.s32.totalorder %s119, %s133
    %p135 = scmp.eq.s32.totalorder %s20, 0
    %p136 = por %p134, %p135
    %s138 = sadd.s32 %s137, 1
    %p141 = scmp.eq.s32.totalorder %s14, 1
    %p142 = scmp.ne.s32.totalorder %s137, %s139
    %p143 = scmp.eq.s32.totalorder %s14, 0
    %p144 = por %p142, %p143
    %p145 = scmp.ne.s32.totalorder %s137, %s139
    %p146 = scmp.eq.s32.totalorder %s19, 1
    %p147 = por %p145, %p146
    %p148 = scmp.ne.s32.totalorder %s139, %s140
    %p149 = scmp.eq.s32.totalorder %s19, 0
    %p150 = por %p148, %p149
    %p151 = scmp.ne.s32.totalorder %s139, %s140
    %p152 = scmp.eq.s32.totalorder %s20, 1
    %p153 = por %p151, %p152
    %p155 = scmp.ne.s32.totalorder %s140, %s154
    %p156 = scmp.eq.s32.totalorder %s20, 0
    %p157 = por %p155, %p156
    %s159 = sadd.s32 %s158, 1
    %p162 = scmp.eq.s32.totalorder %s14, 1
    %p163 = scmp.ne.s32.totalorder %s158, %s160
    %p164 = scmp.eq.s32.totalorder %s14, 0
    %p165 = por %p163, %p164
    %p166 = scmp.ne.s32.totalorder %s158, %s160
    %p167 = scmp.eq.s32.totalorder %s19, 1
    %p168 = por %p166, %p167
    %p169 = scmp.ne.s32.totalorder %s160, %s161
    %p170 = scmp.eq.s32.totalorder %s19, 0
    %p171 = por %p169, %p170
    %p172 = scmp.ne.s32.totalorder %s160, %s161
    %p173 = scmp.eq.s32.totalorder %s20, 1
    %p174 = por %p172, %p173
    %p176 = scmp.ne.s32.totalorder %s161, %s175
    %p177 = scmp.eq.s32.totalorder %s20, 0
    %p178 = por %p176, %p177
    %s179 = ssub.s32 %s14, %s21
    %p180 = scmp.eq.s32.totalorder %s179, 0
    %s182 = sadd.s32 %s181, 1
    %s183 = scalar_select %p180, %s181, %s182
    %p186 = pneg %p180
    %p187 = scmp.eq.s32.totalorder %s14, 1
    %p188 = por %p186, %p187
    %p189 = scmp.ne.s32.totalorder %s181, %s184
    %p190 = scmp.eq.s32.totalorder %s14, 0
    %p191 = por %p189, %p190
    %p192 = scmp.ne.s32.totalorder %s181, %s184
    %p193 = scmp.eq.s32.totalorder %s19, 1
    %p194 = por %p192, %p193
    %p195 = scmp.ne.s32.totalorder %s184, %s185
    %p196 = scmp.eq.s32.totalorder %s19, 0
    %p197 = por %p195, %p196
    %p198 = scmp.ne.s32.totalorder %s184, %s185
    %p199 = scmp.eq.s32.totalorder %s20, 1
    %p200 = por %p198, %p199
    %p202 = scmp.ne.s32.totalorder %s185, %s201
    %p203 = scmp.eq.s32.totalorder %s20, 0
    %p204 = por %p202, %p203
    %p205 = scmp.le.s32.totalorder 1, %s14
    %p206 = scmp.lt.s32.totalorder %s14, 3
    %p207 = pnand %p205, %p206
    %p208 = pneg %p207
    // Predicated region
    $region9: #{tpu_custom_call.1} parent=5 // pred_check
      _
    $region10: #{tpu_custom_call.1} parent=5 // pred_check_branch
      %210 = sbr.rel (%p207) target = $region12
    $region11: #{tpu_custom_call.1} parent=5 // pred_region
      %s211 = ssub.s32 %s14, 1
      // Predicated region
      $region13: #{tpu_custom_call.1} parent=11 // pred_check
        %p212 = pneg %p87
      $region14: #{tpu_custom_call.1} parent=11 // pred_check_branch
        %214 = sbr.rel (%p212) target = $region16
      $region15: #{tpu_custom_call.1} parent=11 // pred_region
        _
      $region16: #{tpu_custom_call.1} parent=11 // pred_fallthru
        _
      // Predicated region
      $region17: #{tpu_custom_call.1} parent=11 // pred_check
        %p215 = pneg %p108
      $region18: #{tpu_custom_call.1} parent=11 // pred_check_branch
        %217 = sbr.rel (%p215) target = $region20
      $region19: #{tpu_custom_call.1} parent=11 // pred_region
        _
      $region20: #{tpu_custom_call.1} parent=11 // pred_fallthru
        _
      // Predicated region
      $region21: #{tpu_custom_call.1} parent=11 // pred_check
        %p218 = pneg %p129
      $region22: #{tpu_custom_call.1} parent=11 // pred_check_branch
        %220 = sbr.rel (%p218) target = $region24
      $region23: #{tpu_custom_call.1} parent=11 // pred_region
        _
      $region24: #{tpu_custom_call.1} parent=11 // pred_fallthru
        _
      // Predicated region
      $region25: #{tpu_custom_call.1} parent=11 // pred_check
        %p221 = pneg %p150
      $region26: #{tpu_custom_call.1} parent=11 // pred_check_branch
        %223 = sbr.rel (%p221) target = $region28
      $region27: #{tpu_custom_call.1} parent=11 // pred_region
        _
      $region28: #{tpu_custom_call.1} parent=11 // pred_fallthru
        _
      // Predicated region
      $region29: #{tpu_custom_call.1} parent=11 // pred_check
        %p224 = pneg %p171
      $region30: #{tpu_custom_call.1} parent=11 // pred_check_branch
        %226 = sbr.rel (%p224) target = $region32
      $region31: #{tpu_custom_call.1} parent=11 // pred_region
        _
      $region32: #{tpu_custom_call.1} parent=11 // pred_fallthru
        _
    $region12: #{tpu_custom_call.1} parent=5 // pred_fallthru
      _
    %p227 = scmp.lt.s32.totalorder %s14, 2
    // Predicated region
    $region33: #{tpu_custom_call.1} parent=5 // pred_check
      %p228 = pneg %p227
    $region34: #{tpu_custom_call.1} parent=5 // pred_check_branch
      %230 = sbr.rel (%p228) target = $region36
    $region35: #{tpu_custom_call.1} parent=5 // pred_region
      // Predicated region
      $region37: #{tpu_custom_call.1} parent=35 // pred_check
        %p231 = pneg %p34
      $region38: #{tpu_custom_call.1} parent=35 // pred_check_branch
        %233 = sbr.rel (%p231) target = $region40
      $region39: #{tpu_custom_call.1} parent=35 // pred_region
        %p234 = scmp.lt.s32.totalorder %s14, 1
        %s235 = scalar_select %p234, %s14, 1
        %s236 = smul.addr %s235, 8
        %s237 = smul.addr %s236, 8
        %s238 = scalar_lea.vmem %s0, %s237
      $region40: #{tpu_custom_call.1} parent=35 // pred_fallthru
        _
      // Predicated region
      $region41: #{tpu_custom_call.1} parent=35 // pred_check
        %p239 = pneg %p60
      $region42: #{tpu_custom_call.1} parent=35 // pred_check_branch
        %241 = sbr.rel (%p239) target = $region44
      $region43: #{tpu_custom_call.1} parent=35 // pred_region
        %p242 = scmp.lt.s32.totalorder %s14, 1
        %s243 = scalar_select %p242, %s14, 1
        %s244 = smul.addr %s243, 20
        %s245 = smul.addr %s244, 8
        %s246 = scalar_lea.vmem %s1, %s245
      $region44: #{tpu_custom_call.1} parent=35 // pred_fallthru
        _
    $region36: #{tpu_custom_call.1} parent=5 // pred_fallthru
      _
    %p247 = scmp.le.s32.totalorder 1, %s14
    %p248 = scmp.lt.s32.totalorder %s14, 3
    %p249 = pnand %p247, %p248
    %p250 = pneg %p249
    // Predicated region
    $region45: #{tpu_custom_call.1} parent=5 // pred_check
      _
    $region46: #{tpu_custom_call.1} parent=5 // pred_check_branch
      %252 = sbr.rel (%p249) target = $region48
    $region47: #{tpu_custom_call.1} parent=5 // pred_region
      %s253 = ssub.s32 %s14, 1
      %p254 = scmp.lt.s32.totalorder %s19, 1
      %s255 = scalar_select %p254, %s19, 1
      %s256 = smul.addr %s255, 8
      %s257 = smul.addr %s256, 8
      %s258 = scalar_lea.vmem %s0, %s257
      %p259 = pneg %p40
      %p260 = pneg %p37
      %p261 = scmp.lt.s32.totalorder %s19, 1
      %s262 = scalar_select %p261, %s19, 1
      %s263 = smul.addr %s262, 20
      %s264 = smul.addr %s263, 8
      %s265 = scalar_lea.vmem %s1, %s264
      %p266 = pneg %p66
      %p267 = pneg %p63
      %p268 = pneg %p87
      %p269 = pneg %p84
      %p270 = pneg %p108
      %p271 = pneg %p105
      %p272 = pneg %p129
      %p273 = pneg %p126
      %p274 = pneg %p150
      %p275 = pneg %p147
      %p276 = pneg %p171
      %p277 = pneg %p168
      %p278 = pneg %p197
      %p279 = pneg %p194
      %p280 = scmp.lt.s32.totalorder %s19, 1
      %s281 = scalar_select %p280, %s19, 1
      %s282 = smul.addr %s281, 8
      %s283 = smul.addr %s282, 8
      %s284 = scalar_lea.vmem %s7, %s283
      %p285 = scmp.lt.s32.totalorder %s19, 1
      %s286 = scalar_select %p285, %s19, 1
      %s287 = smul.addr %s286, 8
      %s288 = smul.addr %s287, 8
      %s289 = scalar_lea.vmem %s0, %s288
      %p290 = scmp.lt.s32.totalorder %s19, 1
      %s291 = scalar_select %p290, %s19, 1
      %s292 = smul.addr %s291, 20
      %s293 = smul.addr %s292, 8
      %s294 = scalar_lea.vmem %s1, %s293
      %p295 = scmp.lt.s32.totalorder %s19, 1
      %s296 = scalar_select %p295, %s19, 1
      %s297 = smul.addr %s296, 8
      %s298 = smul.addr %s297, 8
      %s299 = scalar_lea.vmem %s7, %s298
      %v301 = vld [vmem:[%s294] sm:$0xff]
      %v302 = vld [vmem:[%s294 + $0x10] sm:$0xff]
      %v303 = vld [vmem:[%s294 + $0x20] sm:$0xff]
      %v304 = vld [vmem:[%s294 + $0x30] sm:$0xff]
      %v305 = vld [vmem:[%s294 + $0x40] sm:$0xff]
      %v306 = vld [vmem:[%s294 + $0x50] sm:$0xff]
      %v307 = vld [vmem:[%s294 + $0x60] sm:$0xff]
      %v308 = vld [vmem:[%s294 + $0x70] sm:$0xff]
      %v309 = vpack.c.bf16 %v302, %v301
      %v310 = vpack.c.bf16 %v304, %v303
      %v311 = vpack.c.bf16 %v306, %v305
      %v312 = vpack.c.bf16 %v308, %v307
      %v313 = vld [vmem:[%s2] sm:$0xf]
      %v314 = vld [vmem:[%s2 + $0x4] sm:$0xf]
      %v315 = vld [vmem:[%s294 + $0x1] sm:$0xff]
      %v316 = vld [vmem:[%s294 + $0x11] sm:$0xff]
      %v317 = vld [vmem:[%s294 + $0x21] sm:$0xff]
      %v318 = vld [vmem:[%s294 + $0x31] sm:$0xff]
      %v319 = vld [vmem:[%s294 + $0x41] sm:$0xff]
      %v320 = vld [vmem:[%s294 + $0x51] sm:$0xff]
      %v321 = vld [vmem:[%s294 + $0x61] sm:$0xff]
      %v322 = vld [vmem:[%s294 + $0x71] sm:$0xff]
      %v323 = vpack.c.bf16 %v316, %v315
      %v324 = vpack.c.bf16 %v318, %v317
      %v325 = vpack.c.bf16 %v320, %v319
      %v326 = vpack.c.bf16 %v322, %v321
      %s327 = scalar_lea.vmem %s2, 8
      %v328 = vld [vmem:[%s327] sm:$0xf]
      %v329 = vld [vmem:[%s327 + $0x4] sm:$0xf]
      %v332 = vunpack.c.l.b16 %v328
      %v333 = vunpack.c.l.b16 %v329
      %v334 = vpack.c.b16 %v333, %v332
      %vm336 = vcmask 130048
      %v338 = vsel %vm336, %v323, 0
      %v341 = vsel %vm336, %v324, 0
      %v344 = vsel %vm336, %v325, 0
      %v347 = vsel %vm336, %v326, 0
      %349 = vmatprep.subr.bf16.mxu0 0
      %350 = vmatpush1.bf16.msra.mxu0 0
      %351 = vmatprep.subr.bf16.mxu0 0
      %352 = vmatpush1.bf16.msra.mxu0 0
      %353 = vmatprep.subr.bf16.mxu0 0
      %354 = vmatpush1.bf16.msra.mxu0 0
      %355 = vmatprep.subr.bf16.mxu0 0
      %356 = vmatpush1.bf16.msra.mxu0 0
      %357 = vmatprep.subr.bf16.mxu0 0
      %358 = vmatpush1.bf16.msra.mxu0 0
      %359 = vmatprep.subr.bf16.mxu0 0
      %360 = vmatpush1.bf16.msra.mxu0 0
      %361 = vmatprep.subr.bf16.mxu0 0
      %362 = vmatpush1.bf16.msra.mxu0 0
      %363 = vmatprep.subr.bf16.mxu0 0
      %364 = vmatpush1.bf16.msra.mxu0 %v334
      %365 = vmatprep.subr.bf16.mxu0 0
      %366 = vmatpush2.bf16.msra.mxu0 0
      %367 = vmatprep.subr.bf16.mxu0 0
      %368 = vmatpush2.bf16.msra.mxu0 0
      %369 = vmatprep.subr.bf16.mxu0 0
      %370 = vmatpush2.bf16.msra.mxu0 0
      %371 = vmatprep.subr.bf16.mxu0 0
      %372 = vmatpush2.bf16.msra.mxu0 0
      %373 = vmatprep.subr.bf16.mxu0 0
      %374 = vmatpush2.bf16.msra.mxu0 0
      %375 = vmatprep.subr.bf16.mxu0 0
      %376 = vmatpush2.bf16.msra.mxu0 0
      %377 = vmatprep.subr.bf16.mxu0 0
      %378 = vmatpush2.bf16.msra.mxu0 0
      %379 = vmatprep.subr.bf16.mxu0 0
      %380 = vmatpush2.bf16.msra.mxu0 0
      %381 = vmatprep.mubr.bf16.mxu0 0
      %382 = vmatmul.mubr.bf16.gmra.mxu0 %v338
      %v383 = vpop.f32.mrf.mxu0
      %v384 = vadd.f32 0.0, %v383
      %v385 = vpop.f32.mrf.mxu0
      %v386 = vpop.f32.mrf.mxu0
      %v387 = vadd.f32 0.0, %v386
      %v388 = vpop.f32.mrf.mxu0
      %389 = vmatprep.mubr.bf16.mxu0 0
      %390 = vmatmul.mubr.bf16.gmra.mxu0 %v341
      %v391 = vpop.f32.mrf.mxu0
      %v392 = vadd.f32 0.0, %v391
      %v393 = vpop.f32.mrf.mxu0
      %v394 = vpop.f32.mrf.mxu0
      %v395 = vadd.f32 0.0, %v394
      %v396 = vpop.f32.mrf.mxu0
      %397 = vmatprep.mubr.bf16.mxu0 0
      %398 = vmatmul.mubr.bf16.gmra.mxu0 %v344
      %v399 = vpop.f32.mrf.mxu0
      %v400 = vadd.f32 0.0, %v399
      %v401 = vpop.f32.mrf.mxu0
      %v402 = vpop.f32.mrf.mxu0
      %v403 = vadd.f32 0.0, %v402
      %v404 = vpop.f32.mrf.mxu0
      %405 = vmatprep.mubr.bf16.mxu0 0
      %406 = vmatmul.mubr.bf16.gmra.mxu0 %v347
      %v407 = vpop.f32.mrf.mxu0
      %v408 = vadd.f32 0.0, %v407
      %v409 = vpop.f32.mrf.mxu0
      %v410 = vpop.f32.mrf.mxu0
      %v411 = vadd.f32 0.0, %v410
      %v412 = vpop.f32.mrf.mxu0
      %413 = vdwg.mxu0
      %v416 = vunpack.c.l.b16 %v313
      %v417 = vunpack.c.l.b16 %v314
      %v418 = vpack.c.b16 %v417, %v416
      %v421 = vsel %vm336, %v309, 0
      %v424 = vsel %vm336, %v310, 0
      %v427 = vsel %vm336, %v311, 0
      %v430 = vsel %vm336, %v312, 0
      %432 = vmatprep.subr.bf16.mxu0 0
      %433 = vmatpush1.bf16.msra.mxu0 0
      %434 = vmatprep.subr.bf16.mxu0 0
      %435 = vmatpush1.bf16.msra.mxu0 0
      %436 = vmatprep.subr.bf16.mxu0 0
      %437 = vmatpush1.bf16.msra.mxu0 0
      %438 = vmatprep.subr.bf16.mxu0 0
      %439 = vmatpush1.bf16.msra.mxu0 0
      %440 = vmatprep.subr.bf16.mxu0 0
      %441 = vmatpush1.bf16.msra.mxu0 0
      %442 = vmatprep.subr.bf16.mxu0 0
      %443 = vmatpush1.bf16.msra.mxu0 0
      %444 = vmatprep.subr.bf16.mxu0 0
      %445 = vmatpush1.bf16.msra.mxu0 0
      %446 = vmatprep.subr.bf16.mxu0 0
      %447 = vmatpush1.bf16.msra.mxu0 %v418
      %448 = vmatprep.subr.bf16.mxu0 0
      %449 = vmatpush2.bf16.msra.mxu0 0
      %450 = vmatprep.subr.bf16.mxu0 0
      %451 = vmatpush2.bf16.msra.mxu0 0
      %452 = vmatprep.subr.bf16.mxu0 0
      %453 = vmatpush2.bf16.msra.mxu0 0
      %454 = vmatprep.subr.bf16.mxu0 0
      %455 = vmatpush2.bf16.msra.mxu0 0
      %456 = vmatprep.subr.bf16.mxu0 0
      %457 = vmatpush2.bf16.msra.mxu0 0
      %458 = vmatprep.subr.bf16.mxu0 0
      %459 = vmatpush2.bf16.msra.mxu0 0
      %460 = vmatprep.subr.bf16.mxu0 0
      %461 = vmatpush2.bf16.msra.mxu0 0
      %462 = vmatprep.subr.bf16.mxu0 0
      %463 = vmatpush2.bf16.msra.mxu0 0
      %464 = vmatprep.mubr.bf16.mxu0 0
      %465 = vmatmul.mubr.bf16.gmra.mxu0 %v421
      %v466 = vpop.f32.mrf.mxu0
      %v467 = vadd.f32 %v384, %v466
      %v468 = vpop.f32.mrf.mxu0
      %v469 = vpop.f32.mrf.mxu0
      %v470 = vadd.f32 %v387, %v469
      %v471 = vpop.f32.mrf.mxu0
      %472 = vmatprep.mubr.bf16.mxu0 0
      %473 = vmatmul.mubr.bf16.gmra.mxu0 %v424
      %v474 = vpop.f32.mrf.mxu0
      %v475 = vadd.f32 %v392, %v474
      %v476 = vpop.f32.mrf.mxu0
      %v477 = vpop.f32.mrf.mxu0
      %v478 = vadd.f32 %v395, %v477
      %v479 = vpop.f32.mrf.mxu0
      %480 = vmatprep.mubr.bf16.mxu0 0
      %481 = vmatmul.mubr.bf16.gmra.mxu0 %v427
      %v482 = vpop.f32.mrf.mxu0
      %v483 = vadd.f32 %v400, %v482
      %v484 = vpop.f32.mrf.mxu0
      %v485 = vpop.f32.mrf.mxu0
      %v486 = vadd.f32 %v403, %v485
      %v487 = vpop.f32.mrf.mxu0
      %488 = vmatprep.mubr.bf16.mxu0 0
      %489 = vmatmul.mubr.bf16.gmra.mxu0 %v430
      %v490 = vpop.f32.mrf.mxu0
      %v491 = vadd.f32 %v408, %v490
      %v492 = vpop.f32.mrf.mxu0
      %v493 = vpop.f32.mrf.mxu0
      %v494 = vadd.f32 %v411, %v493
      %v495 = vpop.f32.mrf.mxu0
      %496 = vdwg.mxu0
      %v497 = vld [vmem:[%s294 + $0x2] sm:$0xff]
      %v498 = vld [vmem:[%s294 + $0x12] sm:$0xff]
      %v499 = vld [vmem:[%s294 + $0x22] sm:$0xff]
      %v500 = vld [vmem:[%s294 + $0x32] sm:$0xff]
      %v501 = vld [vmem:[%s294 + $0x42] sm:$0xff]
      %v502 = vld [vmem:[%s294 + $0x52] sm:$0xff]
      %v503 = vld [vmem:[%s294 + $0x62] sm:$0xff]
      %v504 = vld [vmem:[%s294 + $0x72] sm:$0xff]
      %v505 = vpack.c.bf16 %v498, %v497
      %v506 = vpack.c.bf16 %v500, %v499
      %v507 = vpack.c.bf16 %v502, %v501
      %v508 = vpack.c.bf16 %v504, %v503
      %s509 = scalar_lea.vmem %s2, 16
      %v510 = vld [vmem:[%s509] sm:$0xf]
      %v511 = vld [vmem:[%s509 + $0x4] sm:$0xf]
      %v514 = vunpack.c.l.b16 %v510
      %v515 = vunpack.c.l.b16 %v511
      %v516 = vpack.c.b16 %v515, %v514
      %v519 = vsel %vm336, %v505, 0
      %v522 = vsel %vm336, %v506, 0
      %v525 = vsel %vm336, %v507, 0
      %v528 = vsel %vm336, %v508, 0
      %530 = vmatprep.subr.bf16.mxu0 0
      %531 = vmatpush1.bf16.msra.mxu0 0
      %532 = vmatprep.subr.bf16.mxu0 0
      %533 = vmatpush1.bf16.msra.mxu0 0
      %534 = vmatprep.subr.bf16.mxu0 0
      %535 = vmatpush1.bf16.msra.mxu0 0
      %536 = vmatprep.subr.bf16.mxu0 0
      %537 = vmatpush1.bf16.msra.mxu0 0
      %538 = vmatprep.subr.bf16.mxu0 0
      %539 = vmatpush1.bf16.msra.mxu0 0
      %540 = vmatprep.subr.bf16.mxu0 0
      %541 = vmatpush1.bf16.msra.mxu0 0
      %542 = vmatprep.subr.bf16.mxu0 0
      %543 = vmatpush1.bf16.msra.mxu0 0
      %544 = vmatprep.subr.bf16.mxu0 0
      %545 = vmatpush1.bf16.msra.mxu0 %v516
      %546 = vmatprep.subr.bf16.mxu0 0
      %547 = vmatpush2.bf16.msra.mxu0 0
      %548 = vmatprep.subr.bf16.mxu0 0
      %549 = vmatpush2.bf16.msra.mxu0 0
      %550 = vmatprep.subr.bf16.mxu0 0
      %551 = vmatpush2.bf16.msra.mxu0 0
      %552 = vmatprep.subr.bf16.mxu0 0
      %553 = vmatpush2.bf16.msra.mxu0 0
      %554 = vmatprep.subr.bf16.mxu0 0
      %555 = vmatpush2.bf16.msra.mxu0 0
      %556 = vmatprep.subr.bf16.mxu0 0
      %557 = vmatpush2.bf16.msra.mxu0 0
      %558 = vmatprep.subr.bf16.mxu0 0
      %559 = vmatpush2.bf16.msra.mxu0 0
      %560 = vmatprep.subr.bf16.mxu0 0
      %561 = vmatpush2.bf16.msra.mxu0 0
      %562 = vmatprep.mubr.bf16.mxu0 0
      %563 = vmatmul.mubr.bf16.gmra.mxu0 %v519
      %v564 = vpop.f32.mrf.mxu0
      %v565 = vadd.f32 0.0, %v564
      %v566 = vpop.f32.mrf.mxu0
      %v567 = vpop.f32.mrf.mxu0
      %v568 = vadd.f32 0.0, %v567
      %v569 = vpop.f32.mrf.mxu0
      %570 = vmatprep.mubr.bf16.mxu0 0
      %571 = vmatmul.mubr.bf16.gmra.mxu0 %v522
      %v572 = vpop.f32.mrf.mxu0
      %v573 = vadd.f32 0.0, %v572
      %v574 = vpop.f32.mrf.mxu0
      %v575 = vpop.f32.mrf.mxu0
      %v576 = vadd.f32 0.0, %v575
      %v577 = vpop.f32.mrf.mxu0
      %578 = vmatprep.mubr.bf16.mxu0 0
      %579 = vmatmul.mubr.bf16.gmra.mxu0 %v525
      %v580 = vpop.f32.mrf.mxu0
      %v581 = vadd.f32 0.0, %v580
      %v582 = vpop.f32.mrf.mxu0
      %v583 = vpop.f32.mrf.mxu0
      %v584 = vadd.f32 0.0, %v583
      %v585 = vpop.f32.mrf.mxu0
      %586 = vmatprep.mubr.bf16.mxu0 0
      %587 = vmatmul.mubr.bf16.gmra.mxu0 %v528
      %v588 = vpop.f32.mrf.mxu0
      %v589 = vadd.f32 0.0, %v588
      %v590 = vpop.f32.mrf.mxu0
      %v591 = vpop.f32.mrf.mxu0
      %v592 = vadd.f32 0.0, %v591
      %v593 = vpop.f32.mrf.mxu0
      %594 = vdwg.mxu0
      %v595 = vadd.f32 %v467, %v565
      %v596 = vadd.f32 %v470, %v568
      %v597 = vadd.f32 %v475, %v573
      %v598 = vadd.f32 %v478, %v576
      %v599 = vadd.f32 %v483, %v581
      %v600 = vadd.f32 %v486, %v584
      %v601 = vadd.f32 %v491, %v589
      %v602 = vadd.f32 %v494, %v592
      %s603 = scalar_lea.vmem %s294, 16
      %v604 = vld [vmem:[%s603] sm:$0xff]
      %v605 = vld [vmem:[%s603 + $0x10] sm:$0xff]
      %v606 = vld [vmem:[%s603 + $0x20] sm:$0xff]
      %v607 = vld [vmem:[%s603 + $0x30] sm:$0xff]
      %v608 = vld [vmem:[%s603 + $0x40] sm:$0xff]
      %v609 = vld [vmem:[%s603 + $0x50] sm:$0xff]
      %v610 = vld [vmem:[%s603 + $0x60] sm:$0xff]
      %v611 = vld [vmem:[%s603 + $0x70] sm:$0xff]
      %v612 = vpack.c.bf16 %v605, %v604
      %v613 = vpack.c.bf16 %v607, %v606
      %v614 = vpack.c.bf16 %v609, %v608
      %v615 = vpack.c.bf16 %v611, %v610
      %s616 = scalar_lea.vmem %s2, 24
      %v617 = vld [vmem:[%s616] sm:$0xf]
      %v618 = vld [vmem:[%s616 + $0x4] sm:$0xf]
      %v621 = vunpack.c.l.b16 %v617
      %v622 = vunpack.c.l.b16 %v618
      %v623 = vpack.c.b16 %v622, %v621
      %v626 = vsel %vm336, %v612, 0
      %v629 = vsel %vm336, %v613, 0
      %v632 = vsel %vm336, %v614, 0
      %v635 = vsel %vm336, %v615, 0
      %637 = vmatprep.subr.bf16.mxu0 0
      %638 = vmatpush1.bf16.msra.mxu0 0
      %639 = vmatprep.subr.bf16.mxu0 0
      %640 = vmatpush1.bf16.msra.mxu0 0
      %641 = vmatprep.subr.bf16.mxu0 0
      %642 = vmatpush1.bf16.msra.mxu0 0
      %643 = vmatprep.subr.bf16.mxu0 0
      %644 = vmatpush1.bf16.msra.mxu0 0
      %645 = vmatprep.subr.bf16.mxu0 0
      %646 = vmatpush1.bf16.msra.mxu0 0
      %647 = vmatprep.subr.bf16.mxu0 0
      %648 = vmatpush1.bf16.msra.mxu0 0
      %649 = vmatprep.subr.bf16.mxu0 0
      %650 = vmatpush1.bf16.msra.mxu0 0
      %651 = vmatprep.subr.bf16.mxu0 0
      %652 = vmatpush1.bf16.msra.mxu0 %v623
      %653 = vmatprep.subr.bf16.mxu0 0
      %654 = vmatpush2.bf16.msra.mxu0 0
      %655 = vmatprep.subr.bf16.mxu0 0
      %656 = vmatpush2.bf16.msra.mxu0 0
      %657 = vmatprep.subr.bf16.mxu0 0
      %658 = vmatpush2.bf16.msra.mxu0 0
      %659 = vmatprep.subr.bf16.mxu0 0
      %660 = vmatpush2.bf16.msra.mxu0 0
      %661 = vmatprep.subr.bf16.mxu0 0
      %662 = vmatpush2.bf16.msra.mxu0 0
      %663 = vmatprep.subr.bf16.mxu0 0
      %664 = vmatpush2.bf16.msra.mxu0 0
      %665 = vmatprep.subr.bf16.mxu0 0
      %666 = vmatpush2.bf16.msra.mxu0 0
      %667 = vmatprep.subr.bf16.mxu0 0
      %668 = vmatpush2.bf16.msra.mxu0 0
      %669 = vmatprep.mubr.bf16.mxu0 0
      %670 = vmatmul.mubr.bf16.gmra.mxu0 %v626
      %v671 = vpop.f32.mrf.mxu0
      %v672 = vadd.f32 0.0, %v671
      %v673 = vpop.f32.mrf.mxu0
      %v674 = vpop.f32.mrf.mxu0
      %v675 = vadd.f32 0.0, %v674
      %v676 = vpop.f32.mrf.mxu0
      %677 = vmatprep.mubr.bf16.mxu0 0
      %678 = vmatmul.mubr.bf16.gmra.mxu0 %v629
      %v679 = vpop.f32.mrf.mxu0
      %v680 = vadd.f32 0.0, %v679
      %v681 = vpop.f32.mrf.mxu0
      %v682 = vpop.f32.mrf.mxu0
      %v683 = vadd.f32 0.0, %v682
      %v684 = vpop.f32.mrf.mxu0
      %685 = vmatprep.mubr.bf16.mxu0 0
      %686 = vmatmul.mubr.bf16.gmra.mxu0 %v632
      %v687 = vpop.f32.mrf.mxu0
      %v688 = vadd.f32 0.0, %v687
      %v689 = vpop.f32.mrf.mxu0
      %v690 = vpop.f32.mrf.mxu0
      %v691 = vadd.f32 0.0, %v690
      %v692 = vpop.f32.mrf.mxu0
      %693 = vmatprep.mubr.bf16.mxu0 0
      %694 = vmatmul.mubr.bf16.gmra.mxu0 %v635
      %v695 = vpop.f32.mrf.mxu0
      %v696 = vadd.f32 0.0, %v695
      %v697 = vpop.f32.mrf.mxu0
      %v698 = vpop.f32.mrf.mxu0
      %v699 = vadd.f32 0.0, %v698
      %v700 = vpop.f32.mrf.mxu0
      %701 = vdwg.mxu0
      %v702 = vadd.f32 %v595, %v672
      %v703 = vadd.f32 %v596, %v675
      %v704 = vadd.f32 %v597, %v680
      %v705 = vadd.f32 %v598, %v683
      %v706 = vadd.f32 %v599, %v688
      %v707 = vadd.f32 %v600, %v691
      %v708 = vadd.f32 %v601, %v696
      %v709 = vadd.f32 %v602, %v699
      %v710 = vld [vmem:[%s603 + $0x1] sm:$0xff]
      %v711 = vld [vmem:[%s603 + $0x11] sm:$0xff]
      %v712 = vld [vmem:[%s603 + $0x21] sm:$0xff]
      %v713 = vld [vmem:[%s603 + $0x31] sm:$0xff]
      %v714 = vld [vmem:[%s603 + $0x41] sm:$0xff]
      %v715 = vld [vmem:[%s603 + $0x51] sm:$0xff]
      %v716 = vld [vmem:[%s603 + $0x61] sm:$0xff]
      %v717 = vld [vmem:[%s603 + $0x71] sm:$0xff]
      %v718 = vpack.c.bf16 %v711, %v710
      %v719 = vpack.c.bf16 %v713, %v712
      %v720 = vpack.c.bf16 %v715, %v714
      %v721 = vpack.c.bf16 %v717, %v716
      %s722 = scalar_lea.vmem %s2, 32
      %v723 = vld [vmem:[%s722] sm:$0xf]
      %v724 = vld [vmem:[%s722 + $0x4] sm:$0xf]
      %v727 = vunpack.c.l.b16 %v723
      %v728 = vunpack.c.l.b16 %v724
      %v729 = vpack.c.b16 %v728, %v727
      %v732 = vsel %vm336, %v718, 0
      %v735 = vsel %vm336, %v719, 0
      %v738 = vsel %vm336, %v720, 0
      %v741 = vsel %vm336, %v721, 0
      %743 = vmatprep.subr.bf16.mxu0 0
      %744 = vmatpush1.bf16.msra.mxu0 0
      %745 = vmatprep.subr.bf16.mxu0 0
      %746 = vmatpush1.bf16.msra.mxu0 0
      %747 = vmatprep.subr.bf16.mxu0 0
      %748 = vmatpush1.bf16.msra.mxu0 0
      %749 = vmatprep.subr.bf16.mxu0 0
      %750 = vmatpush1.bf16.msra.mxu0 0
      %751 = vmatprep.subr.bf16.mxu0 0
      %752 = vmatpush1.bf16.msra.mxu0 0
      %753 = vmatprep.subr.bf16.mxu0 0
      %754 = vmatpush1.bf16.msra.mxu0 0
      %755 = vmatprep.subr.bf16.mxu0 0
      %756 = vmatpush1.bf16.msra.mxu0 0
      %757 = vmatprep.subr.bf16.mxu0 0
      %758 = vmatpush1.bf16.msra.mxu0 %v729
      %759 = vmatprep.subr.bf16.mxu0 0
      %760 = vmatpush2.bf16.msra.mxu0 0
      %761 = vmatprep.subr.bf16.mxu0 0
      %762 = vmatpush2.bf16.msra.mxu0 0
      %763 = vmatprep.subr.bf16.mxu0 0
      %764 = vmatpush2.bf16.msra.mxu0 0
      %765 = vmatprep.subr.bf16.mxu0 0
      %766 = vmatpush2.bf16.msra.mxu0 0
      %767 = vmatprep.subr.bf16.mxu0 0
      %768 = vmatpush2.bf16.msra.mxu0 0
      %769 = vmatprep.subr.bf16.mxu0 0
      %770 = vmatpush2.bf16.msra.mxu0 0
      %771 = vmatprep.subr.bf16.mxu0 0
      %772 = vmatpush2.bf16.msra.mxu0 0
      %773 = vmatprep.subr.bf16.mxu0 0
      %774 = vmatpush2.bf16.msra.mxu0 0
      %775 = vmatprep.mubr.bf16.mxu0 0
      %776 = vmatmul.mubr.bf16.gmra.mxu0 %v732
      %v777 = vpop.f32.mrf.mxu0
      %v778 = vadd.f32 0.0, %v777
      %v779 = vpop.f32.mrf.mxu0
      %v780 = vpop.f32.mrf.mxu0
      %v781 = vadd.f32 0.0, %v780
      %v782 = vpop.f32.mrf.mxu0
      %783 = vmatprep.mubr.bf16.mxu0 0
      %784 = vmatmul.mubr.bf16.gmra.mxu0 %v735
      %v785 = vpop.f32.mrf.mxu0
      %v786 = vadd.f32 0.0, %v785
      %v787 = vpop.f32.mrf.mxu0
      %v788 = vpop.f32.mrf.mxu0
      %v789 = vadd.f32 0.0, %v788
      %v790 = vpop.f32.mrf.mxu0
      %791 = vmatprep.mubr.bf16.mxu0 0
      %792 = vmatmul.mubr.bf16.gmra.mxu0 %v738
      %v793 = vpop.f32.mrf.mxu0
      %v794 = vadd.f32 0.0, %v793
      %v795 = vpop.f32.mrf.mxu0
      %v796 = vpop.f32.mrf.mxu0
      %v797 = vadd.f32 0.0, %v796
      %v798 = vpop.f32.mrf.mxu0
      %799 = vmatprep.mubr.bf16.mxu0 0
      %800 = vmatmul.mubr.bf16.gmra.mxu0 %v741
      %v801 = vpop.f32.mrf.mxu0
      %v802 = vadd.f32 0.0, %v801
      %v803 = vpop.f32.mrf.mxu0
      %v804 = vpop.f32.mrf.mxu0
      %v805 = vadd.f32 0.0, %v804
      %v806 = vpop.f32.mrf.mxu0
      %807 = vdwg.mxu0
      %v808 = vadd.f32 %v702, %v778
      %v809 = vadd.f32 %v703, %v781
      %v810 = vadd.f32 %v704, %v786
      %v811 = vadd.f32 %v705, %v789
      %v812 = vadd.f32 %v706, %v794
      %v813 = vadd.f32 %v707, %v797
      %v814 = vadd.f32 %v708, %v802
      %v815 = vadd.f32 %v709, %v805
      %v816 = vld [vmem:[%s603 + $0x2] sm:$0xff]
      %v817 = vld [vmem:[%s603 + $0x12] sm:$0xff]
      %v818 = vld [vmem:[%s603 + $0x22] sm:$0xff]
      %v819 = vld [vmem:[%s603 + $0x32] sm:$0xff]
      %v820 = vld [vmem:[%s603 + $0x42] sm:$0xff]
      %v821 = vld [vmem:[%s603 + $0x52] sm:$0xff]
      %v822 = vld [vmem:[%s603 + $0x62] sm:$0xff]
      %v823 = vld [vmem:[%s603 + $0x72] sm:$0xff]
      %v824 = vpack.c.bf16 %v817, %v816
      %v825 = vpack.c.bf16 %v819, %v818
      %v826 = vpack.c.bf16 %v821, %v820
      %v827 = vpack.c.bf16 %v823, %v822
      %s828 = scalar_lea.vmem %s2, 40
      %v829 = vld [vmem:[%s828] sm:$0xf]
      %v830 = vld [vmem:[%s828 + $0x4] sm:$0xf]
      %v833 = vunpack.c.l.b16 %v829
      %v834 = vunpack.c.l.b16 %v830
      %v835 = vpack.c.b16 %v834, %v833
      %v838 = vsel %vm336, %v824, 0
      %v841 = vsel %vm336, %v825, 0
      %v844 = vsel %vm336, %v826, 0
      %v847 = vsel %vm336, %v827, 0
      %849 = vmatprep.subr.bf16.mxu0 0
      %850 = vmatpush1.bf16.msra.mxu0 0
      %851 = vmatprep.subr.bf16.mxu0 0
      %852 = vmatpush1.bf16.msra.mxu0 0
      %853 = vmatprep.subr.bf16.mxu0 0
      %854 = vmatpush1.bf16.msra.mxu0 0
      %855 = vmatprep.subr.bf16.mxu0 0
      %856 = vmatpush1.bf16.msra.mxu0 0
      %857 = vmatprep.subr.bf16.mxu0 0
      %858 = vmatpush1.bf16.msra.mxu0 0
      %859 = vmatprep.subr.bf16.mxu0 0
      %860 = vmatpush1.bf16.msra.mxu0 0
      %861 = vmatprep.subr.bf16.mxu0 0
      %862 = vmatpush1.bf16.msra.mxu0 0
      %863 = vmatprep.subr.bf16.mxu0 0
      %864 = vmatpush1.bf16.msra.mxu0 %v835
      %865 = vmatprep.subr.bf16.mxu0 0
      %866 = vmatpush2.bf16.msra.mxu0 0
      %867 = vmatprep.subr.bf16.mxu0 0
      %868 = vmatpush2.bf16.msra.mxu0 0
      %869 = vmatprep.subr.bf16.mxu0 0
      %870 = vmatpush2.bf16.msra.mxu0 0
      %871 = vmatprep.subr.bf16.mxu0 0
      %872 = vmatpush2.bf16.msra.mxu0 0
      %873 = vmatprep.subr.bf16.mxu0 0
      %874 = vmatpush2.bf16.msra.mxu0 0
      %875 = vmatprep.subr.bf16.mxu0 0
      %876 = vmatpush2.bf16.msra.mxu0 0
      %877 = vmatprep.subr.bf16.mxu0 0
      %878 = vmatpush2.bf16.msra.mxu0 0
      %879 = vmatprep.subr.bf16.mxu0 0
      %880 = vmatpush2.bf16.msra.mxu0 0
      %881 = vmatprep.mubr.bf16.mxu0 0
      %882 = vmatmul.mubr.bf16.gmra.mxu0 %v838
      %v883 = vpop.f32.mrf.mxu0
      %v884 = vadd.f32 0.0, %v883
      %v885 = vpop.f32.mrf.mxu0
      %v886 = vpop.f32.mrf.mxu0
      %v887 = vadd.f32 0.0, %v886
      %v888 = vpop.f32.mrf.mxu0
      %889 = vmatprep.mubr.bf16.mxu0 0
      %890 = vmatmul.mubr.bf16.gmra.mxu0 %v841
      %v891 = vpop.f32.mrf.mxu0
      %v892 = vadd.f32 0.0, %v891
      %v893 = vpop.f32.mrf.mxu0
      %v894 = vpop.f32.mrf.mxu0
      %v895 = vadd.f32 0.0, %v894
      %v896 = vpop.f32.mrf.mxu0
      %897 = vmatprep.mubr.bf16.mxu0 0
      %898 = vmatmul.mubr.bf16.gmra.mxu0 %v844
      %v899 = vpop.f32.mrf.mxu0
      %v900 = vadd.f32 0.0, %v899
      %v901 = vpop.f32.mrf.mxu0
      %v902 = vpop.f32.mrf.mxu0
      %v903 = vadd.f32 0.0, %v902
      %v904 = vpop.f32.mrf.mxu0
      %905 = vmatprep.mubr.bf16.mxu0 0
      %906 = vmatmul.mubr.bf16.gmra.mxu0 %v847
      %v907 = vpop.f32.mrf.mxu0
      %v908 = vadd.f32 0.0, %v907
      %v909 = vpop.f32.mrf.mxu0
      %v910 = vpop.f32.mrf.mxu0
      %v911 = vadd.f32 0.0, %v910
      %v912 = vpop.f32.mrf.mxu0
      %913 = vdwg.mxu0
      %v914 = vadd.f32 %v808, %v884
      %v915 = vadd.f32 %v809, %v887
      %v916 = vadd.f32 %v810, %v892
      %v917 = vadd.f32 %v811, %v895
      %v918 = vadd.f32 %v812, %v900
      %v919 = vadd.f32 %v813, %v903
      %v920 = vadd.f32 %v814, %v908
      %v921 = vadd.f32 %v815, %v911
      %s922 = scalar_lea.vmem %s294, 32
      %v923 = vld [vmem:[%s922] sm:$0xff]
      %v924 = vld [vmem:[%s922 + $0x10] sm:$0xff]
      %v925 = vld [vmem:[%s922 + $0x20] sm:$0xff]
      %v926 = vld [vmem:[%s922 + $0x30] sm:$0xff]
      %v927 = vld [vmem:[%s922 + $0x40] sm:$0xff]
      %v928 = vld [vmem:[%s922 + $0x50] sm:$0xff]
      %v929 = vld [vmem:[%s922 + $0x60] sm:$0xff]
      %v930 = vld [vmem:[%s922 + $0x70] sm:$0xff]
      %v931 = vpack.c.bf16 %v924, %v923
      %v932 = vpack.c.bf16 %v926, %v925
      %v933 = vpack.c.bf16 %v928, %v927
      %v934 = vpack.c.bf16 %v930, %v929
      %s935 = scalar_lea.vmem %s2, 48
      %v936 = vld [vmem:[%s935] sm:$0xf]
      %v937 = vld [vmem:[%s935 + $0x4] sm:$0xf]
      %v940 = vunpack.c.l.b16 %v936
      %v941 = vunpack.c.l.b16 %v937
      %v942 = vpack.c.b16 %v941, %v940
      %v945 = vsel %vm336, %v931, 0
      %v948 = vsel %vm336, %v932, 0
      %v951 = vsel %vm336, %v933, 0
      %v954 = vsel %vm336, %v934, 0
      %956 = vmatprep.subr.bf16.mxu0 0
      %957 = vmatpush1.bf16.msra.mxu0 0
      %958 = vmatprep.subr.bf16.mxu0 0
      %959 = vmatpush1.bf16.msra.mxu0 0
      %960 = vmatprep.subr.bf16.mxu0 0
      %961 = vmatpush1.bf16.msra.mxu0 0
      %962 = vmatprep.subr.bf16.mxu0 0
      %963 = vmatpush1.bf16.msra.mxu0 0
      %964 = vmatprep.subr.bf16.mxu0 0
      %965 = vmatpush1.bf16.msra.mxu0 0
      %966 = vmatprep.subr.bf16.mxu0 0
      %967 = vmatpush1.bf16.msra.mxu0 0
      %968 = vmatprep.subr.bf16.mxu0 0
      %969 = vmatpush1.bf16.msra.mxu0 0
      %970 = vmatprep.subr.bf16.mxu0 0
      %971 = vmatpush1.bf16.msra.mxu0 %v942
      %972 = vmatprep.subr.bf16.mxu0 0
      %973 = vmatpush2.bf16.msra.mxu0 0
      %974 = vmatprep.subr.bf16.mxu0 0
      %975 = vmatpush2.bf16.msra.mxu0 0
      %976 = vmatprep.subr.bf16.mxu0 0
      %977 = vmatpush2.bf16.msra.mxu0 0
      %978 = vmatprep.subr.bf16.mxu0 0
      %979 = vmatpush2.bf16.msra.mxu0 0
      %980 = vmatprep.subr.bf16.mxu0 0
      %981 = vmatpush2.bf16.msra.mxu0 0
      %982 = vmatprep.subr.bf16.mxu0 0
      %983 = vmatpush2.bf16.msra.mxu0 0
      %984 = vmatprep.subr.bf16.mxu0 0
      %985 = vmatpush2.bf16.msra.mxu0 0
      %986 = vmatprep.subr.bf16.mxu0 0
      %987 = vmatpush2.bf16.msra.mxu0 0
      %988 = vmatprep.mubr.bf16.mxu0 0
      %989 = vmatmul.mubr.bf16.gmra.mxu0 %v945
      %v990 = vpop.f32.mrf.mxu0
      %v991 = vadd.f32 0.0, %v990
      %v992 = vpop.f32.mrf.mxu0
      %v993 = vpop.f32.mrf.mxu0
      %v994 = vadd.f32 0.0, %v993
      %v995 = vpop.f32.mrf.mxu0
      %996 = vmatprep.mubr.bf16.mxu0 0
      %997 = vmatmul.mubr.bf16.gmra.mxu0 %v948
      %v998 = vpop.f32.mrf.mxu0
      %v999 = vadd.f32 0.0, %v998
      %v1000 = vpop.f32.mrf.mxu0
      %v1001 = vpop.f32.mrf.mxu0
      %v1002 = vadd.f32 0.0, %v1001
      %v1003 = vpop.f32.mrf.mxu0
      %1004 = vmatprep.mubr.bf16.mxu0 0
      %1005 = vmatmul.mubr.bf16.gmra.mxu0 %v951
      %v1006 = vpop.f32.mrf.mxu0
      %v1007 = vadd.f32 0.0, %v1006
      %v1008 = vpop.f32.mrf.mxu0
      %v1009 = vpop.f32.mrf.mxu0
      %v1010 = vadd.f32 0.0, %v1009
      %v1011 = vpop.f32.mrf.mxu0
      %1012 = vmatprep.mubr.bf16.mxu0 0
      %1013 = vmatmul.mubr.bf16.gmra.mxu0 %v954
      %v1014 = vpop.f32.mrf.mxu0
      %v1015 = vadd.f32 0.0, %v1014
      %v1016 = vpop.f32.mrf.mxu0
      %v1017 = vpop.f32.mrf.mxu0
      %v1018 = vadd.f32 0.0, %v1017
      %v1019 = vpop.f32.mrf.mxu0
      %1020 = vdwg.mxu0
      %v1021 = vadd.f32 %v914, %v991
      %v1022 = vadd.f32 %v915, %v994
      %v1023 = vadd.f32 %v916, %v999
      %v1024 = vadd.f32 %v917, %v1002
      %v1025 = vadd.f32 %v918, %v1007
      %v1026 = vadd.f32 %v919, %v1010
      %v1027 = vadd.f32 %v920, %v1015
      %v1028 = vadd.f32 %v921, %v1018
      %v1029 = vld [vmem:[%s922 + $0x1] sm:$0xff]
      %v1030 = vld [vmem:[%s922 + $0x11] sm:$0xff]
      %v1031 = vld [vmem:[%s922 + $0x21] sm:$0xff]
      %v1032 = vld [vmem:[%s922 + $0x31] sm:$0xff]
      %v1033 = vld [vmem:[%s922 + $0x41] sm:$0xff]
      %v1034 = vld [vmem:[%s922 + $0x51] sm:$0xff]
      %v1035 = vld [vmem:[%s922 + $0x61] sm:$0xff]
      %v1036 = vld [vmem:[%s922 + $0x71] sm:$0xff]
      %v1037 = vpack.c.bf16 %v1030, %v1029
      %v1038 = vpack.c.bf16 %v1032, %v1031
      %v1039 = vpack.c.bf16 %v1034, %v1033
      %v1040 = vpack.c.bf16 %v1036, %v1035
      %s1041 = scalar_lea.vmem %s2, 56
      %v1042 = vld [vmem:[%s1041] sm:$0xf]
      %v1043 = vld [vmem:[%s1041 + $0x4] sm:$0xf]
      %v1046 = vunpack.c.l.b16 %v1042
      %v1047 = vunpack.c.l.b16 %v1043
      %v1048 = vpack.c.b16 %v1047, %v1046
      %v1051 = vsel %vm336, %v1037, 0
      %v1054 = vsel %vm336, %v1038, 0
      %v1057 = vsel %vm336, %v1039, 0
      %v1060 = vsel %vm336, %v1040, 0
      %1062 = vmatprep.subr.bf16.mxu0 0
      %1063 = vmatpush1.bf16.msra.mxu0 0
      %1064 = vmatprep.subr.bf16.mxu0 0
      %1065 = vmatpush1.bf16.msra.mxu0 0
      %1066 = vmatprep.subr.bf16.mxu0 0
      %1067 = vmatpush1.bf16.msra.mxu0 0
      %1068 = vmatprep.subr.bf16.mxu0 0
      %1069 = vmatpush1.bf16.msra.mxu0 0
      %1070 = vmatprep.subr.bf16.mxu0 0
      %1071 = vmatpush1.bf16.msra.mxu0 0
      %1072 = vmatprep.subr.bf16.mxu0 0
      %1073 = vmatpush1.bf16.msra.mxu0 0
      %1074 = vmatprep.subr.bf16.mxu0 0
      %1075 = vmatpush1.bf16.msra.mxu0 0
      %1076 = vmatprep.subr.bf16.mxu0 0
      %1077 = vmatpush1.bf16.msra.mxu0 %v1048
      %1078 = vmatprep.subr.bf16.mxu0 0
      %1079 = vmatpush2.bf16.msra.mxu0 0
      %1080 = vmatprep.subr.bf16.mxu0 0
      %1081 = vmatpush2.bf16.msra.mxu0 0
      %1082 = vmatprep.subr.bf16.mxu0 0
      %1083 = vmatpush2.bf16.msra.mxu0 0
      %1084 = vmatprep.subr.bf16.mxu0 0
      %1085 = vmatpush2.bf16.msra.mxu0 0
      %1086 = vmatprep.subr.bf16.mxu0 0
      %1087 = vmatpush2.bf16.msra.mxu0 0
      %1088 = vmatprep.subr.bf16.mxu0 0
      %1089 = vmatpush2.bf16.msra.mxu0 0
      %1090 = vmatprep.subr.bf16.mxu0 0
      %1091 = vmatpush2.bf16.msra.mxu0 0
      %1092 = vmatprep.subr.bf16.mxu0 0
      %1093 = vmatpush2.bf16.msra.mxu0 0
      %1094 = vmatprep.mubr.bf16.mxu0 0
      %1095 = vmatmul.mubr.bf16.gmra.mxu0 %v1051
      %v1096 = vpop.f32.mrf.mxu0
      %v1097 = vadd.f32 0.0, %v1096
      %v1098 = vpop.f32.mrf.mxu0
      %v1099 = vpop.f32.mrf.mxu0
      %v1100 = vadd.f32 0.0, %v1099
      %v1101 = vpop.f32.mrf.mxu0
      %1102 = vmatprep.mubr.bf16.mxu0 0
      %1103 = vmatmul.mubr.bf16.gmra.mxu0 %v1054
      %v1104 = vpop.f32.mrf.mxu0
      %v1105 = vadd.f32 0.0, %v1104
      %v1106 = vpop.f32.mrf.mxu0
      %v1107 = vpop.f32.mrf.mxu0
      %v1108 = vadd.f32 0.0, %v1107
      %v1109 = vpop.f32.mrf.mxu0
      %1110 = vmatprep.mubr.bf16.mxu0 0
      %1111 = vmatmul.mubr.bf16.gmra.mxu0 %v1057
      %v1112 = vpop.f32.mrf.mxu0
      %v1113 = vadd.f32 0.0, %v1112
      %v1114 = vpop.f32.mrf.mxu0
      %v1115 = vpop.f32.mrf.mxu0
      %v1116 = vadd.f32 0.0, %v1115
      %v1117 = vpop.f32.mrf.mxu0
      %1118 = vmatprep.mubr.bf16.mxu0 0
      %1119 = vmatmul.mubr.bf16.gmra.mxu0 %v1060
      %v1120 = vpop.f32.mrf.mxu0
      %v1121 = vadd.f32 0.0, %v1120
      %v1122 = vpop.f32.mrf.mxu0
      %v1123 = vpop.f32.mrf.mxu0
      %v1124 = vadd.f32 0.0, %v1123
      %v1125 = vpop.f32.mrf.mxu0
      %1126 = vdwg.mxu0
      %v1127 = vadd.f32 %v1021, %v1097
      %v1128 = vadd.f32 %v1022, %v1100
      %v1129 = vadd.f32 %v1023, %v1105
      %v1130 = vadd.f32 %v1024, %v1108
      %v1131 = vadd.f32 %v1025, %v1113
      %v1132 = vadd.f32 %v1026, %v1116
      %v1133 = vadd.f32 %v1027, %v1121
      %v1134 = vadd.f32 %v1028, %v1124
      %v1135 = vld [vmem:[%s922 + $0x2] sm:$0xff]
      %v1136 = vld [vmem:[%s922 + $0x12] sm:$0xff]
      %v1137 = vld [vmem:[%s922 + $0x22] sm:$0xff]
      %v1138 = vld [vmem:[%s922 + $0x32] sm:$0xff]
      %v1139 = vld [vmem:[%s922 + $0x42] sm:$0xff]
      %v1140 = vld [vmem:[%s922 + $0x52] sm:$0xff]
      %v1141 = vld [vmem:[%s922 + $0x62] sm:$0xff]
      %v1142 = vld [vmem:[%s922 + $0x72] sm:$0xff]
      %v1143 = vpack.c.bf16 %v1136, %v1135
      %v1144 = vpack.c.bf16 %v1138, %v1137
      %v1145 = vpack.c.bf16 %v1140, %v1139
      %v1146 = vpack.c.bf16 %v1142, %v1141
      %s1147 = scalar_lea.vmem %s2, 64
      %v1148 = vld [vmem:[%s1147] sm:$0xf]
      %v1149 = vld [vmem:[%s1147 + $0x4] sm:$0xf]
      %v1152 = vunpack.c.l.b16 %v1148
      %v1153 = vunpack.c.l.b16 %v1149
      %v1154 = vpack.c.b16 %v1153, %v1152
      %v1157 = vsel %vm336, %v1143, 0
      %v1160 = vsel %vm336, %v1144, 0
      %v1163 = vsel %vm336, %v1145, 0
      %v1166 = vsel %vm336, %v1146, 0
      %1168 = vmatprep.subr.bf16.mxu0 0
      %1169 = vmatpush1.bf16.msra.mxu0 0
      %1170 = vmatprep.subr.bf16.mxu0 0
      %1171 = vmatpush1.bf16.msra.mxu0 0
      %1172 = vmatprep.subr.bf16.mxu0 0
      %1173 = vmatpush1.bf16.msra.mxu0 0
      %1174 = vmatprep.subr.bf16.mxu0 0
      %1175 = vmatpush1.bf16.msra.mxu0 0
      %1176 = vmatprep.subr.bf16.mxu0 0
      %1177 = vmatpush1.bf16.msra.mxu0 0
      %1178 = vmatprep.subr.bf16.mxu0 0
      %1179 = vmatpush1.bf16.msra.mxu0 0
      %1180 = vmatprep.subr.bf16.mxu0 0
      %1181 = vmatpush1.bf16.msra.mxu0 0
      %1182 = vmatprep.subr.bf16.mxu0 0
      %1183 = vmatpush1.bf16.msra.mxu0 %v1154
      %1184 = vmatprep.subr.bf16.mxu0 0
      %1185 = vmatpush2.bf16.msra.mxu0 0
      %1186 = vmatprep.subr.bf16.mxu0 0
      %1187 = vmatpush2.bf16.msra.mxu0 0
      %1188 = vmatprep.subr.bf16.mxu0 0
      %1189 = vmatpush2.bf16.msra.mxu0 0
      %1190 = vmatprep.subr.bf16.mxu0 0
      %1191 = vmatpush2.bf16.msra.mxu0 0
      %1192 = vmatprep.subr.bf16.mxu0 0
      %1193 = vmatpush2.bf16.msra.mxu0 0
      %1194 = vmatprep.subr.bf16.mxu0 0
      %1195 = vmatpush2.bf16.msra.mxu0 0
      %1196 = vmatprep.subr.bf16.mxu0 0
      %1197 = vmatpush2.bf16.msra.mxu0 0
      %1198 = vmatprep.subr.bf16.mxu0 0
      %1199 = vmatpush2.bf16.msra.mxu0 0
      %1200 = vmatprep.mubr.bf16.mxu0 0
      %1201 = vmatmul.mubr.bf16.gmra.mxu0 %v1157
      %v1202 = vpop.f32.mrf.mxu0
      %v1203 = vadd.f32 0.0, %v1202
      %v1204 = vpop.f32.mrf.mxu0
      %v1205 = vpop.f32.mrf.mxu0
      %v1206 = vadd.f32 0.0, %v1205
      %v1207 = vpop.f32.mrf.mxu0
      %1208 = vmatprep.mubr.bf16.mxu0 0
      %1209 = vmatmul.mubr.bf16.gmra.mxu0 %v1160
      %v1210 = vpop.f32.mrf.mxu0
      %v1211 = vadd.f32 0.0, %v1210
      %v1212 = vpop.f32.mrf.mxu0
      %v1213 = vpop.f32.mrf.mxu0
      %v1214 = vadd.f32 0.0, %v1213
      %v1215 = vpop.f32.mrf.mxu0
      %1216 = vmatprep.mubr.bf16.mxu0 0
      %1217 = vmatmul.mubr.bf16.gmra.mxu0 %v1163
      %v1218 = vpop.f32.mrf.mxu0
      %v1219 = vadd.f32 0.0, %v1218
      %v1220 = vpop.f32.mrf.mxu0
      %v1221 = vpop.f32.mrf.mxu0
      %v1222 = vadd.f32 0.0, %v1221
      %v1223 = vpop.f32.mrf.mxu0
      %1224 = vmatprep.mubr.bf16.mxu0 0
      %1225 = vmatmul.mubr.bf16.gmra.mxu0 %v1166
      %v1226 = vpop.f32.mrf.mxu0
      %v1227 = vadd.f32 0.0, %v1226
      %v1228 = vpop.f32.mrf.mxu0
      %v1229 = vpop.f32.mrf.mxu0
      %v1230 = vadd.f32 0.0, %v1229
      %v1231 = vpop.f32.mrf.mxu0
      %1232 = vdwg.mxu0
      %v1233 = vadd.f32 %v1127, %v1203
      %v1234 = vadd.f32 %v1128, %v1206
      %v1235 = vadd.f32 %v1129, %v1211
      %v1236 = vadd.f32 %v1130, %v1214
      %v1237 = vadd.f32 %v1131, %v1219
      %v1238 = vadd.f32 %v1132, %v1222
      %v1239 = vadd.f32 %v1133, %v1227
      %v1240 = vadd.f32 %v1134, %v1230
      %v1241 = vld [vmem:[%s3] sm:$0x1]
      %v1243 = vlaneseq
      %v1244 = vshrl.u32 %v1243, 7
      %v1245 = vsub.s32 0, %v1244
      %v1246 = vrot.slane %v1241, %v1245
      %v1248 = vadd.f32 %v1233, %v1246
      %v1249 = vadd.f32 %v1234, %v1246
      %v1250 = vadd.f32 %v1235, %v1246
      %v1251 = vadd.f32 %v1236, %v1246
      %v1252 = vadd.f32 %v1237, %v1246
      %v1253 = vadd.f32 %v1238, %v1246
      %v1254 = vadd.f32 %v1239, %v1246
      %v1255 = vadd.f32 %v1240, %v1246
      %v1256 = vmax.f32 %v1248, 0.0
      %v1257 = vmax.f32 %v1249, 0.0
      %v1258 = vmax.f32 %v1250, 0.0
      %v1259 = vmax.f32 %v1251, 0.0
      %v1260 = vmax.f32 %v1252, 0.0
      %v1261 = vmax.f32 %v1253, 0.0
      %v1262 = vmax.f32 %v1254, 0.0
      %v1263 = vmax.f32 %v1255, 0.0
      %vm1264 = vcmask 261120
      %1265 = vst.msk [vmem:[#allocation2] sm:$0xff] %vm1264, 0.0
      %vm1266 = vcmask 254976
      %1267 = vst.msk [vmem:[#allocation2 + $0x8] sm:$0x3] %vm1266, 0.0
      %s1268 = scalar_lea.vmem [#allocation2], 144
      %1269 = vst.msk [vmem:[%s1268] sm:$0xff] %vm1264, 0.0
      %1270 = vst.msk [vmem:[%s1268 + $0x8] sm:$0x3] %vm1266, 0.0
      %vm1271 = vcmask 253952
      %1272 = vst.msk [vmem:[#allocation2] sm:$0x1] %vm1271, 0.0
      %1273 = vst.msk [vmem:[#allocation2 + $0x10] sm:$0x1] %vm1271, 0.0
      %1274 = vst.msk [vmem:[#allocation2 + $0x20] sm:$0x1] %vm1271, 0.0
      %1275 = vst.msk [vmem:[#allocation2 + $0x30] sm:$0x1] %vm1271, 0.0
      %1276 = vst.msk [vmem:[#allocation2 + $0x40] sm:$0x1] %vm1271, 0.0
      %1277 = vst.msk [vmem:[#allocation2 + $0x50] sm:$0x1] %vm1271, 0.0
      %1278 = vst.msk [vmem:[#allocation2 + $0x60] sm:$0x1] %vm1271, 0.0
      %1279 = vst.msk [vmem:[#allocation2 + $0x70] sm:$0x1] %vm1271, 0.0
      %1280 = vst.msk [vmem:[#allocation2 + $0x80] sm:$0x1] %vm1271, 0.0
      %1281 = vst.msk [vmem:[#allocation2 + $0x90] sm:$0x1] %vm1271, 0.0
      %1282 = vst.msk [vmem:[#allocation2 + $0x9] sm:$0x1] %vm1271, 0.0
      %1283 = vst.msk [vmem:[#allocation2 + $0x19] sm:$0x1] %vm1271, 0.0
      %1284 = vst.msk [vmem:[#allocation2 + $0x29] sm:$0x1] %vm1271, 0.0
      %1285 = vst.msk [vmem:[#allocation2 + $0x39] sm:$0x1] %vm1271, 0.0
      %1286 = vst.msk [vmem:[#allocation2 + $0x49] sm:$0x1] %vm1271, 0.0
      %1287 = vst.msk [vmem:[#allocation2 + $0x59] sm:$0x1] %vm1271, 0.0
      %1288 = vst.msk [vmem:[#allocation2 + $0x69] sm:$0x1] %vm1271, 0.0
      %1289 = vst.msk [vmem:[#allocation2 + $0x79] sm:$0x1] %vm1271, 0.0
      %1290 = vst.msk [vmem:[#allocation2 + $0x89] sm:$0x1] %vm1271, 0.0
      %1291 = vst.msk [vmem:[#allocation2 + $0x99] sm:$0x1] %vm1271, 0.0
      %s1292 = scalar_lea.vmem [#allocation2], 16
      %1293 = vst.msk [vmem:[%s1292 + $0x1] sm:$0xff] %vm1264, %v1256
      %1294 = vst.msk [vmem:[%s1292 + $0x11] sm:$0xff] %vm1264, %v1257
      %1295 = vst.msk [vmem:[%s1292 + $0x21] sm:$0xff] %vm1264, %v1258
      %1296 = vst.msk [vmem:[%s1292 + $0x31] sm:$0xff] %vm1264, %v1259
      %1297 = vst.msk [vmem:[%s1292 + $0x41] sm:$0xff] %vm1264, %v1260
      %1298 = vst.msk [vmem:[%s1292 + $0x51] sm:$0xff] %vm1264, %v1261
      %1299 = vst.msk [vmem:[%s1292 + $0x61] sm:$0xff] %vm1264, %v1262
      %1300 = vst.msk [vmem:[%s1292 + $0x71] sm:$0xff] %vm1264, %v1263
      %v1301 = vld [vmem:[#allocation2] sm:$0xff]
      %v1302 = vld [vmem:[#allocation2 + $0x10] sm:$0xff]
      %v1303 = vld [vmem:[#allocation2 + $0x20] sm:$0xff]
      %v1304 = vld [vmem:[#allocation2 + $0x30] sm:$0xff]
      %v1305 = vld [vmem:[#allocation2 + $0x40] sm:$0xff]
      %v1306 = vld [vmem:[#allocation2 + $0x50] sm:$0xff]
      %v1307 = vld [vmem:[#allocation2 + $0x60] sm:$0xff]
      %v1308 = vld [vmem:[#allocation2 + $0x70] sm:$0xff]
      %v1309 = vpack.c.bf16 %v1302, %v1301
      %v1310 = vpack.c.bf16 %v1304, %v1303
      %v1311 = vpack.c.bf16 %v1306, %v1305
      %v1312 = vpack.c.bf16 %v1308, %v1307
      %v1313 = vld [vmem:[%s4] sm:$0xf]
      %v1314 = vld [vmem:[%s4 + $0x4] sm:$0xf]
      %v1315 = vld [vmem:[%s4 + $0x8] sm:$0xf]
      %v1316 = vld [vmem:[%s4 + $0xc] sm:$0xf]
      %v1317 = vld [vmem:[#allocation2 + $0x1] sm:$0xff]
      %v1318 = vld [vmem:[#allocation2 + $0x11] sm:$0xff]
      %v1319 = vld [vmem:[#allocation2 + $0x21] sm:$0xff]
      %v1320 = vld [vmem:[#allocation2 + $0x31] sm:$0xff]
      %v1321 = vld [vmem:[#allocation2 + $0x41] sm:$0xff]
      %v1322 = vld [vmem:[#allocation2 + $0x51] sm:$0xff]
      %v1323 = vld [vmem:[#allocation2 + $0x61] sm:$0xff]
      %v1324 = vld [vmem:[#allocation2 + $0x71] sm:$0xff]
      %v1325 = vpack.c.bf16 %v1318, %v1317
      %v1326 = vpack.c.bf16 %v1320, %v1319
      %v1327 = vpack.c.bf16 %v1322, %v1321
      %v1328 = vpack.c.bf16 %v1324, %v1323
      %s1329 = scalar_lea.vmem %s4, 16
      %v1330 = vld [vmem:[%s1329] sm:$0xf]
      %v1331 = vld [vmem:[%s1329 + $0x4] sm:$0xf]
      %v1332 = vld [vmem:[%s1329 + $0x8] sm:$0xf]
      %v1333 = vld [vmem:[%s1329 + $0xc] sm:$0xf]
      %v1338 = vunpack.c.l.b16 %v1330
      %v1339 = vunpack.c.l.b16 %v1331
      %v1340 = vunpack.c.l.b16 %v1332
      %v1341 = vunpack.c.l.b16 %v1333
      %v1342 = vpack.c.b16 %v1339, %v1338
      %v1343 = vpack.c.b16 %v1341, %v1340
      %v1347 = vsel %vm1264, %v1325, 0
      %v1350 = vsel %vm1264, %v1326, 0
      %v1353 = vsel %vm1264, %v1327, 0
      %v1356 = vsel %vm1264, %v1328, 0
      %1358 = vmatprep.subr.bf16.mxu0 0
      %1359 = vmatpush1.bf16.msra.mxu0 0
      %1360 = vmatprep.subr.bf16.mxu0 0
      %1361 = vmatpush1.bf16.msra.mxu0 0
      %1362 = vmatprep.subr.bf16.mxu0 0
      %1363 = vmatpush1.bf16.msra.mxu0 0
      %1364 = vmatprep.subr.bf16.mxu0 0
      %1365 = vmatpush1.bf16.msra.mxu0 0
      %1366 = vmatprep.subr.bf16.mxu0 0
      %1367 = vmatpush1.bf16.msra.mxu0 0
      %1368 = vmatprep.subr.bf16.mxu0 0
      %1369 = vmatpush1.bf16.msra.mxu0 0
      %1370 = vmatprep.subr.bf16.mxu0 0
      %1371 = vmatpush1.bf16.msra.mxu0 %v1343
      %1372 = vmatprep.subr.bf16.mxu0 0
      %1373 = vmatpush1.bf16.msra.mxu0 %v1342
      %1374 = vmatprep.subr.bf16.mxu0 0
      %1375 = vmatpush2.bf16.msra.mxu0 0
      %1376 = vmatprep.subr.bf16.mxu0 0
      %1377 = vmatpush2.bf16.msra.mxu0 0
      %1378 = vmatprep.subr.bf16.mxu0 0
      %1379 = vmatpush2.bf16.msra.mxu0 0
      %1380 = vmatprep.subr.bf16.mxu0 0
      %1381 = vmatpush2.bf16.msra.mxu0 0
      %1382 = vmatprep.subr.bf16.mxu0 0
      %1383 = vmatpush2.bf16.msra.mxu0 0
      %1384 = vmatprep.subr.bf16.mxu0 0
      %1385 = vmatpush2.bf16.msra.mxu0 0
      %1386 = vmatprep.subr.bf16.mxu0 0
      %1387 = vmatpush2.bf16.msra.mxu0 0
      %1388 = vmatprep.subr.bf16.mxu0 0
      %1389 = vmatpush2.bf16.msra.mxu0 0
      %1390 = vmatprep.mubr.bf16.mxu0 0
      %1391 = vmatmul.mubr.bf16.gmra.mxu0 %v1347
      %v1392 = vpop.f32.mrf.mxu0
      %v1393 = vadd.f32 0.0, %v1392
      %v1394 = vpop.f32.mrf.mxu0
      %v1395 = vpop.f32.mrf.mxu0
      %v1396 = vadd.f32 0.0, %v1395
      %v1397 = vpop.f32.mrf.mxu0
      %1398 = vmatprep.mubr.bf16.mxu0 0
      %1399 = vmatmul.mubr.bf16.gmra.mxu0 %v1350
      %v1400 = vpop.f32.mrf.mxu0
      %v1401 = vadd.f32 0.0, %v1400
      %v1402 = vpop.f32.mrf.mxu0
      %v1403 = vpop.f32.mrf.mxu0
      %v1404 = vadd.f32 0.0, %v1403
      %v1405 = vpop.f32.mrf.mxu0
      %1406 = vmatprep.mubr.bf16.mxu0 0
      %1407 = vmatmul.mubr.bf16.gmra.mxu0 %v1353
      %v1408 = vpop.f32.mrf.mxu0
      %v1409 = vadd.f32 0.0, %v1408
      %v1410 = vpop.f32.mrf.mxu0
      %v1411 = vpop.f32.mrf.mxu0
      %v1412 = vadd.f32 0.0, %v1411
      %v1413 = vpop.f32.mrf.mxu0
      %1414 = vmatprep.mubr.bf16.mxu0 0
      %1415 = vmatmul.mubr.bf16.gmra.mxu0 %v1356
      %v1416 = vpop.f32.mrf.mxu0
      %v1417 = vadd.f32 0.0, %v1416
      %v1418 = vpop.f32.mrf.mxu0
      %v1419 = vpop.f32.mrf.mxu0
      %v1420 = vadd.f32 0.0, %v1419
      %v1421 = vpop.f32.mrf.mxu0
      %1422 = vdwg.mxu0
      %v1427 = vunpack.c.l.b16 %v1313
      %v1428 = vunpack.c.l.b16 %v1314
      %v1429 = vunpack.c.l.b16 %v1315
      %v1430 = vunpack.c.l.b16 %v1316
      %v1431 = vpack.c.b16 %v1428, %v1427
      %v1432 = vpack.c.b16 %v1430, %v1429
      %v1436 = vsel %vm1264, %v1309, 0
      %v1439 = vsel %vm1264, %v1310, 0
      %v1442 = vsel %vm1264, %v1311, 0
      %v1445 = vsel %vm1264, %v1312, 0
      %1447 = vmatprep.subr.bf16.mxu0 0
      %1448 = vmatpush1.bf16.msra.mxu0 0
      %1449 = vmatprep.subr.bf16.mxu0 0
      %1450 = vmatpush1.bf16.msra.mxu0 0
      %1451 = vmatprep.subr.bf16.mxu0 0
      %1452 = vmatpush1.bf16.msra.mxu0 0
      %1453 = vmatprep.subr.bf16.mxu0 0
      %1454 = vmatpush1.bf16.msra.mxu0 0
      %1455 = vmatprep.subr.bf16.mxu0 0
      %1456 = vmatpush1.bf16.msra.mxu0 0
      %1457 = vmatprep.subr.bf16.mxu0 0
      %1458 = vmatpush1.bf16.msra.mxu0 0
      %1459 = vmatprep.subr.bf16.mxu0 0
      %1460 = vmatpush1.bf16.msra.mxu0 %v1432
      %1461 = vmatprep.subr.bf16.mxu0 0
      %1462 = vmatpush1.bf16.msra.mxu0 %v1431
      %1463 = vmatprep.subr.bf16.mxu0 0
      %1464 = vmatpush2.bf16.msra.mxu0 0
      %1465 = vmatprep.subr.bf16.mxu0 0
      %1466 = vmatpush2.bf16.msra.mxu0 0
      %1467 = vmatprep.subr.bf16.mxu0 0
      %1468 = vmatpush2.bf16.msra.mxu0 0
      %1469 = vmatprep.subr.bf16.mxu0 0
      %1470 = vmatpush2.bf16.msra.mxu0 0
      %1471 = vmatprep.subr.bf16.mxu0 0
      %1472 = vmatpush2.bf16.msra.mxu0 0
      %1473 = vmatprep.subr.bf16.mxu0 0
      %1474 = vmatpush2.bf16.msra.mxu0 0
      %1475 = vmatprep.subr.bf16.mxu0 0
      %1476 = vmatpush2.bf16.msra.mxu0 0
      %1477 = vmatprep.subr.bf16.mxu0 0
      %1478 = vmatpush2.bf16.msra.mxu0 0
      %1479 = vmatprep.mubr.bf16.mxu0 0
      %1480 = vmatmul.mubr.bf16.gmra.mxu0 %v1436
      %v1481 = vpop.f32.mrf.mxu0
      %v1482 = vadd.f32 %v1393, %v1481
      %v1483 = vpop.f32.mrf.mxu0
      %v1484 = vpop.f32.mrf.mxu0
      %v1485 = vadd.f32 %v1396, %v1484
      %v1486 = vpop.f32.mrf.mxu0
      %1487 = vmatprep.mubr.bf16.mxu0 0
      %1488 = vmatmul.mubr.bf16.gmra.mxu0 %v1439
      %v1489 = vpop.f32.mrf.mxu0
      %v1490 = vadd.f32 %v1401, %v1489
      %v1491 = vpop.f32.mrf.mxu0
      %v1492 = vpop.f32.mrf.mxu0
      %v1493 = vadd.f32 %v1404, %v1492
      %v1494 = vpop.f32.mrf.mxu0
      %1495 = vmatprep.mubr.bf16.mxu0 0
      %1496 = vmatmul.mubr.bf16.gmra.mxu0 %v1442
      %v1497 = vpop.f32.mrf.mxu0
      %v1498 = vadd.f32 %v1409, %v1497
      %v1499 = vpop.f32.mrf.mxu0
      %v1500 = vpop.f32.mrf.mxu0
      %v1501 = vadd.f32 %v1412, %v1500
      %v1502 = vpop.f32.mrf.mxu0
      %1503 = vmatprep.mubr.bf16.mxu0 0
      %1504 = vmatmul.mubr.bf16.gmra.mxu0 %v1445
      %v1505 = vpop.f32.mrf.mxu0
      %v1506 = vadd.f32 %v1417, %v1505
      %v1507 = vpop.f32.mrf.mxu0
      %v1508 = vpop.f32.mrf.mxu0
      %v1509 = vadd.f32 %v1420, %v1508
      %v1510 = vpop.f32.mrf.mxu0
      %1511 = vdwg.mxu0
      %v1512 = vld [vmem:[#allocation2 + $0x2] sm:$0xff]
      %v1513 = vld [vmem:[#allocation2 + $0x12] sm:$0xff]
      %v1514 = vld [vmem:[#allocation2 + $0x22] sm:$0xff]
      %v1515 = vld [vmem:[#allocation2 + $0x32] sm:$0xff]
      %v1516 = vld [vmem:[#allocation2 + $0x42] sm:$0xff]
      %v1517 = vld [vmem:[#allocation2 + $0x52] sm:$0xff]
      %v1518 = vld [vmem:[#allocation2 + $0x62] sm:$0xff]
      %v1519 = vld [vmem:[#allocation2 + $0x72] sm:$0xff]
      %v1520 = vpack.c.bf16 %v1513, %v1512
      %v1521 = vpack.c.bf16 %v1515, %v1514
      %v1522 = vpack.c.bf16 %v1517, %v1516
      %v1523 = vpack.c.bf16 %v1519, %v1518
      %s1524 = scalar_lea.vmem %s4, 32
      %v1525 = vld [vmem:[%s1524] sm:$0xf]
      %v1526 = vld [vmem:[%s1524 + $0x4] sm:$0xf]
      %v1527 = vld [vmem:[%s1524 + $0x8] sm:$0xf]
      %v1528 = vld [vmem:[%s1524 + $0xc] sm:$0xf]
      %v1533 = vunpack.c.l.b16 %v1525
      %v1534 = vunpack.c.l.b16 %v1526
      %v1535 = vunpack.c.l.b16 %v1527
      %v1536 = vunpack.c.l.b16 %v1528
      %v1537 = vpack.c.b16 %v1534, %v1533
      %v1538 = vpack.c.b16 %v1536, %v1535
      %v1542 = vsel %vm1264, %v1520, 0
      %v1545 = vsel %vm1264, %v1521, 0
      %v1548 = vsel %vm1264, %v1522, 0
      %v1551 = vsel %vm1264, %v1523, 0
      %1553 = vmatprep.subr.bf16.mxu0 0
      %1554 = vmatpush1.bf16.msra.mxu0 0
      %1555 = vmatprep.subr.bf16.mxu0 0
      %1556 = vmatpush1.bf16.msra.mxu0 0
      %1557 = vmatprep.subr.bf16.mxu0 0
      %1558 = vmatpush1.bf16.msra.mxu0 0
      %1559 = vmatprep.subr.bf16.mxu0 0
      %1560 = vmatpush1.bf16.msra.mxu0 0
      %1561 = vmatprep.subr.bf16.mxu0 0
      %1562 = vmatpush1.bf16.msra.mxu0 0
      %1563 = vmatprep.subr.bf16.mxu0 0
      %1564 = vmatpush1.bf16.msra.mxu0 0
      %1565 = vmatprep.subr.bf16.mxu0 0
      %1566 = vmatpush1.bf16.msra.mxu0 %v1538
      %1567 = vmatprep.subr.bf16.mxu0 0
      %1568 = vmatpush1.bf16.msra.mxu0 %v1537
      %1569 = vmatprep.subr.bf16.mxu0 0
      %1570 = vmatpush2.bf16.msra.mxu0 0
      %1571 = vmatprep.subr.bf16.mxu0 0
      %1572 = vmatpush2.bf16.msra.mxu0 0
      %1573 = vmatprep.subr.bf16.mxu0 0
      %1574 = vmatpush2.bf16.msra.mxu0 0
      %1575 = vmatprep.subr.bf16.mxu0 0
      %1576 = vmatpush2.bf16.msra.mxu0 0
      %1577 = vmatprep.subr.bf16.mxu0 0
      %1578 = vmatpush2.bf16.msra.mxu0 0
      %1579 = vmatprep.subr.bf16.mxu0 0
      %1580 = vmatpush2.bf16.msra.mxu0 0
      %1581 = vmatprep.subr.bf16.mxu0 0
      %1582 = vmatpush2.bf16.msra.mxu0 0
      %1583 = vmatprep.subr.bf16.mxu0 0
      %1584 = vmatpush2.bf16.msra.mxu0 0
      %1585 = vmatprep.mubr.bf16.mxu0 0
      %1586 = vmatmul.mubr.bf16.gmra.mxu0 %v1542
      %v1587 = vpop.f32.mrf.mxu0
      %v1588 = vadd.f32 0.0, %v1587
      %v1589 = vpop.f32.mrf.mxu0
      %v1590 = vpop.f32.mrf.mxu0
      %v1591 = vadd.f32 0.0, %v1590
      %v1592 = vpop.f32.mrf.mxu0
      %1593 = vmatprep.mubr.bf16.mxu0 0
      %1594 = vmatmul.mubr.bf16.gmra.mxu0 %v1545
      %v1595 = vpop.f32.mrf.mxu0
      %v1596 = vadd.f32 0.0, %v1595
      %v1597 = vpop.f32.mrf.mxu0
      %v1598 = vpop.f32.mrf.mxu0
      %v1599 = vadd.f32 0.0, %v1598
      %v1600 = vpop.f32.mrf.mxu0
      %1601 = vmatprep.mubr.bf16.mxu0 0
      %1602 = vmatmul.mubr.bf16.gmra.mxu0 %v1548
      %v1603 = vpop.f32.mrf.mxu0
      %v1604 = vadd.f32 0.0, %v1603
      %v1605 = vpop.f32.mrf.mxu0
      %v1606 = vpop.f32.mrf.mxu0
      %v1607 = vadd.f32 0.0, %v1606
      %v1608 = vpop.f32.mrf.mxu0
      %1609 = vmatprep.mubr.bf16.mxu0 0
      %1610 = vmatmul.mubr.bf16.gmra.mxu0 %v1551
      %v1611 = vpop.f32.mrf.mxu0
      %v1612 = vadd.f32 0.0, %v1611
      %v1613 = vpop.f32.mrf.mxu0
      %v1614 = vpop.f32.mrf.mxu0
      %v1615 = vadd.f32 0.0, %v1614
      %v1616 = vpop.f32.mrf.mxu0
      %1617 = vdwg.mxu0
      %v1618 = vadd.f32 %v1482, %v1588
      %v1619 = vadd.f32 %v1485, %v1591
      %v1620 = vadd.f32 %v1490, %v1596
      %v1621 = vadd.f32 %v1493, %v1599
      %v1622 = vadd.f32 %v1498, %v1604
      %v1623 = vadd.f32 %v1501, %v1607
      %v1624 = vadd.f32 %v1506, %v1612
      %v1625 = vadd.f32 %v1509, %v1615
      %v1626 = vld [vmem:[%s1292] sm:$0xff]
      %v1627 = vld [vmem:[%s1292 + $0x10] sm:$0xff]
      %v1628 = vld [vmem:[%s1292 + $0x20] sm:$0xff]
      %v1629 = vld [vmem:[%s1292 + $0x30] sm:$0xff]
      %v1630 = vld [vmem:[%s1292 + $0x40] sm:$0xff]
      %v1631 = vld [vmem:[%s1292 + $0x50] sm:$0xff]
      %v1632 = vld [vmem:[%s1292 + $0x60] sm:$0xff]
      %v1633 = vld [vmem:[%s1292 + $0x70] sm:$0xff]
      %v1634 = vpack.c.bf16 %v1627, %v1626
      %v1635 = vpack.c.bf16 %v1629, %v1628
      %v1636 = vpack.c.bf16 %v1631, %v1630
      %v1637 = vpack.c.bf16 %v1633, %v1632
      %s1638 = scalar_lea.vmem %s4, 48
      %v1639 = vld [vmem:[%s1638] sm:$0xf]
      %v1640 = vld [vmem:[%s1638 + $0x4] sm:$0xf]
      %v1641 = vld [vmem:[%s1638 + $0x8] sm:$0xf]
      %v1642 = vld [vmem:[%s1638 + $0xc] sm:$0xf]
      %v1647 = vunpack.c.l.b16 %v1639
      %v1648 = vunpack.c.l.b16 %v1640
      %v1649 = vunpack.c.l.b16 %v1641
      %v1650 = vunpack.c.l.b16 %v1642
      %v1651 = vpack.c.b16 %v1648, %v1647
      %v1652 = vpack.c.b16 %v1650, %v1649
      %v1656 = vsel %vm1264, %v1634, 0
      %v1659 = vsel %vm1264, %v1635, 0
      %v1662 = vsel %vm1264, %v1636, 0
      %v1665 = vsel %vm1264, %v1637, 0
      %1667 = vmatprep.subr.bf16.mxu0 0
      %1668 = vmatpush1.bf16.msra.mxu0 0
      %1669 = vmatprep.subr.bf16.mxu0 0
      %1670 = vmatpush1.bf16.msra.mxu0 0
      %1671 = vmatprep.subr.bf16.mxu0 0
      %1672 = vmatpush1.bf16.msra.mxu0 0
      %1673 = vmatprep.subr.bf16.mxu0 0
      %1674 = vmatpush1.bf16.msra.mxu0 0
      %1675 = vmatprep.subr.bf16.mxu0 0
      %1676 = vmatpush1.bf16.msra.mxu0 0
      %1677 = vmatprep.subr.bf16.mxu0 0
      %1678 = vmatpush1.bf16.msra.mxu0 0
      %1679 = vmatprep.subr.bf16.mxu0 0
      %1680 = vmatpush1.bf16.msra.mxu0 %v1652
      %1681 = vmatprep.subr.bf16.mxu0 0
      %1682 = vmatpush1.bf16.msra.mxu0 %v1651
      %1683 = vmatprep.subr.bf16.mxu0 0
      %1684 = vmatpush2.bf16.msra.mxu0 0
      %1685 = vmatprep.subr.bf16.mxu0 0
      %1686 = vmatpush2.bf16.msra.mxu0 0
      %1687 = vmatprep.subr.bf16.mxu0 0
      %1688 = vmatpush2.bf16.msra.mxu0 0
      %1689 = vmatprep.subr.bf16.mxu0 0
      %1690 = vmatpush2.bf16.msra.mxu0 0
      %1691 = vmatprep.subr.bf16.mxu0 0
      %1692 = vmatpush2.bf16.msra.mxu0 0
      %1693 = vmatprep.subr.bf16.mxu0 0
      %1694 = vmatpush2.bf16.msra.mxu0 0
      %1695 = vmatprep.subr.bf16.mxu0 0
      %1696 = vmatpush2.bf16.msra.mxu0 0
      %1697 = vmatprep.subr.bf16.mxu0 0
      %1698 = vmatpush2.bf16.msra.mxu0 0
      %1699 = vmatprep.mubr.bf16.mxu0 0
      %1700 = vmatmul.mubr.bf16.gmra.mxu0 %v1656
      %v1701 = vpop.f32.mrf.mxu0
      %v1702 = vadd.f32 0.0, %v1701
      %v1703 = vpop.f32.mrf.mxu0
      %v1704 = vpop.f32.mrf.mxu0
      %v1705 = vadd.f32 0.0, %v1704
      %v1706 = vpop.f32.mrf.mxu0
      %1707 = vmatprep.mubr.bf16.mxu0 0
      %1708 = vmatmul.mubr.bf16.gmra.mxu0 %v1659
      %v1709 = vpop.f32.mrf.mxu0
      %v1710 = vadd.f32 0.0, %v1709
      %v1711 = vpop.f32.mrf.mxu0
      %v1712 = vpop.f32.mrf.mxu0
      %v1713 = vadd.f32 0.0, %v1712
      %v1714 = vpop.f32.mrf.mxu0
      %1715 = vmatprep.mubr.bf16.mxu0 0
      %1716 = vmatmul.mubr.bf16.gmra.mxu0 %v1662
      %v1717 = vpop.f32.mrf.mxu0
      %v1718 = vadd.f32 0.0, %v1717
      %v1719 = vpop.f32.mrf.mxu0
      %v1720 = vpop.f32.mrf.mxu0
      %v1721 = vadd.f32 0.0, %v1720
      %v1722 = vpop.f32.mrf.mxu0
      %1723 = vmatprep.mubr.bf16.mxu0 0
      %1724 = vmatmul.mubr.bf16.gmra.mxu0 %v1665
      %v1725 = vpop.f32.mrf.mxu0
      %v1726 = vadd.f32 0.0, %v1725
      %v1727 = vpop.f32.mrf.mxu0
      %v1728 = vpop.f32.mrf.mxu0
      %v1729 = vadd.f32 0.0, %v1728
      %v1730 = vpop.f32.mrf.mxu0
      %1731 = vdwg.mxu0
      %v1732 = vadd.f32 %v1618, %v1702
      %v1733 = vadd.f32 %v1619, %v1705
      %v1734 = vadd.f32 %v1620, %v1710
      %v1735 = vadd.f32 %v1621, %v1713
      %v1736 = vadd.f32 %v1622, %v1718
      %v1737 = vadd.f32 %v1623, %v1721
      %v1738 = vadd.f32 %v1624, %v1726
      %v1739 = vadd.f32 %v1625, %v1729
      %v1740 = vld [vmem:[%s1292 + $0x1] sm:$0xff]
      %v1741 = vld [vmem:[%s1292 + $0x11] sm:$0xff]
      %v1742 = vld [vmem:[%s1292 + $0x21] sm:$0xff]
      %v1743 = vld [vmem:[%s1292 + $0x31] sm:$0xff]
      %v1744 = vld [vmem:[%s1292 + $0x41] sm:$0xff]
      %v1745 = vld [vmem:[%s1292 + $0x51] sm:$0xff]
      %v1746 = vld [vmem:[%s1292 + $0x61] sm:$0xff]
      %v1747 = vld [vmem:[%s1292 + $0x71] sm:$0xff]
      %v1748 = vpack.c.bf16 %v1741, %v1740
      %v1749 = vpack.c.bf16 %v1743, %v1742
      %v1750 = vpack.c.bf16 %v1745, %v1744
      %v1751 = vpack.c.bf16 %v1747, %v1746
      %s1752 = scalar_lea.vmem %s4, 64
      %v1753 = vld [vmem:[%s1752] sm:$0xf]
      %v1754 = vld [vmem:[%s1752 + $0x4] sm:$0xf]
      %v1755 = vld [vmem:[%s1752 + $0x8] sm:$0xf]
      %v1756 = vld [vmem:[%s1752 + $0xc] sm:$0xf]
      %v1761 = vunpack.c.l.b16 %v1753
      %v1762 = vunpack.c.l.b16 %v1754
      %v1763 = vunpack.c.l.b16 %v1755
      %v1764 = vunpack.c.l.b16 %v1756
      %v1765 = vpack.c.b16 %v1762, %v1761
      %v1766 = vpack.c.b16 %v1764, %v1763
      %v1770 = vsel %vm1264, %v1748, 0
      %v1773 = vsel %vm1264, %v1749, 0
      %v1776 = vsel %vm1264, %v1750, 0
      %v1779 = vsel %vm1264, %v1751, 0
      %1781 = vmatprep.subr.bf16.mxu0 0
      %1782 = vmatpush1.bf16.msra.mxu0 0
      %1783 = vmatprep.subr.bf16.mxu0 0
      %1784 = vmatpush1.bf16.msra.mxu0 0
      %1785 = vmatprep.subr.bf16.mxu0 0
      %1786 = vmatpush1.bf16.msra.mxu0 0
      %1787 = vmatprep.subr.bf16.mxu0 0
      %1788 = vmatpush1.bf16.msra.mxu0 0
      %1789 = vmatprep.subr.bf16.mxu0 0
      %1790 = vmatpush1.bf16.msra.mxu0 0
      %1791 = vmatprep.subr.bf16.mxu0 0
      %1792 = vmatpush1.bf16.msra.mxu0 0
      %1793 = vmatprep.subr.bf16.mxu0 0
      %1794 = vmatpush1.bf16.msra.mxu0 %v1766
      %1795 = vmatprep.subr.bf16.mxu0 0
      %1796 = vmatpush1.bf16.msra.mxu0 %v1765
      %1797 = vmatprep.subr.bf16.mxu0 0
      %1798 = vmatpush2.bf16.msra.mxu0 0
      %1799 = vmatprep.subr.bf16.mxu0 0
      %1800 = vmatpush2.bf16.msra.mxu0 0
      %1801 = vmatprep.subr.bf16.mxu0 0
      %1802 = vmatpush2.bf16.msra.mxu0 0
      %1803 = vmatprep.subr.bf16.mxu0 0
      %1804 = vmatpush2.bf16.msra.mxu0 0
      %1805 = vmatprep.subr.bf16.mxu0 0
      %1806 = vmatpush2.bf16.msra.mxu0 0
      %1807 = vmatprep.subr.bf16.mxu0 0
      %1808 = vmatpush2.bf16.msra.mxu0 0
      %1809 = vmatprep.subr.bf16.mxu0 0
      %1810 = vmatpush2.bf16.msra.mxu0 0
      %1811 = vmatprep.subr.bf16.mxu0 0
      %1812 = vmatpush2.bf16.msra.mxu0 0
      %1813 = vmatprep.mubr.bf16.mxu0 0
      %1814 = vmatmul.mubr.bf16.gmra.mxu0 %v1770
      %v1815 = vpop.f32.mrf.mxu0
      %v1816 = vadd.f32 0.0, %v1815
      %v1817 = vpop.f32.mrf.mxu0
      %v1818 = vpop.f32.mrf.mxu0
      %v1819 = vadd.f32 0.0, %v1818
      %v1820 = vpop.f32.mrf.mxu0
      %1821 = vmatprep.mubr.bf16.mxu0 0
      %1822 = vmatmul.mubr.bf16.gmra.mxu0 %v1773
      %v1823 = vpop.f32.mrf.mxu0
      %v1824 = vadd.f32 0.0, %v1823
      %v1825 = vpop.f32.mrf.mxu0
      %v1826 = vpop.f32.mrf.mxu0
      %v1827 = vadd.f32 0.0, %v1826
      %v1828 = vpop.f32.mrf.mxu0
      %1829 = vmatprep.mubr.bf16.mxu0 0
      %1830 = vmatmul.mubr.bf16.gmra.mxu0 %v1776
      %v1831 = vpop.f32.mrf.mxu0
      %v1832 = vadd.f32 0.0, %v1831
      %v1833 = vpop.f32.mrf.mxu0
      %v1834 = vpop.f32.mrf.mxu0
      %v1835 = vadd.f32 0.0, %v1834
      %v1836 = vpop.f32.mrf.mxu0
      %1837 = vmatprep.mubr.bf16.mxu0 0
      %1838 = vmatmul.mubr.bf16.gmra.mxu0 %v1779
      %v1839 = vpop.f32.mrf.mxu0
      %v1840 = vadd.f32 0.0, %v1839
      %v1841 = vpop.f32.mrf.mxu0
      %v1842 = vpop.f32.mrf.mxu0
      %v1843 = vadd.f32 0.0, %v1842
      %v1844 = vpop.f32.mrf.mxu0
      %1845 = vdwg.mxu0
      %v1846 = vadd.f32 %v1732, %v1816
      %v1847 = vadd.f32 %v1733, %v1819
      %v1848 = vadd.f32 %v1734, %v1824
      %v1849 = vadd.f32 %v1735, %v1827
      %v1850 = vadd.f32 %v1736, %v1832
      %v1851 = vadd.f32 %v1737, %v1835
      %v1852 = vadd.f32 %v1738, %v1840
      %v1853 = vadd.f32 %v1739, %v1843
      %v1854 = vld [vmem:[%s1292 + $0x2] sm:$0xff]
      %v1855 = vld [vmem:[%s1292 + $0x12] sm:$0xff]
      %v1856 = vld [vmem:[%s1292 + $0x22] sm:$0xff]
      %v1857 = vld [vmem:[%s1292 + $0x32] sm:$0xff]
      %v1858 = vld [vmem:[%s1292 + $0x42] sm:$0xff]
      %v1859 = vld [vmem:[%s1292 + $0x52] sm:$0xff]
      %v1860 = vld [vmem:[%s1292 + $0x62] sm:$0xff]
      %v1861 = vld [vmem:[%s1292 + $0x72] sm:$0xff]
      %v1862 = vpack.c.bf16 %v1855, %v1854
      %v1863 = vpack.c.bf16 %v1857, %v1856
      %v1864 = vpack.c.bf16 %v1859, %v1858
      %v1865 = vpack.c.bf16 %v1861, %v1860
      %s1866 = scalar_lea.vmem %s4, 80
      %v1867 = vld [vmem:[%s1866] sm:$0xf]
      %v1868 = vld [vmem:[%s1866 + $0x4] sm:$0xf]
      %v1869 = vld [vmem:[%s1866 + $0x8] sm:$0xf]
      %v1870 = vld [vmem:[%s1866 + $0xc] sm:$0xf]
      %v1875 = vunpack.c.l.b16 %v1867
      %v1876 = vunpack.c.l.b16 %v1868
      %v1877 = vunpack.c.l.b16 %v1869
      %v1878 = vunpack.c.l.b16 %v1870
      %v1879 = vpack.c.b16 %v1876, %v1875
      %v1880 = vpack.c.b16 %v1878, %v1877
      %v1884 = vsel %vm1264, %v1862, 0
      %v1887 = vsel %vm1264, %v1863, 0
      %v1890 = vsel %vm1264, %v1864, 0
      %v1893 = vsel %vm1264, %v1865, 0
      %1895 = vmatprep.subr.bf16.mxu0 0
      %1896 = vmatpush1.bf16.msra.mxu0 0
      %1897 = vmatprep.subr.bf16.mxu0 0
      %1898 = vmatpush1.bf16.msra.mxu0 0
      %1899 = vmatprep.subr.bf16.mxu0 0
      %1900 = vmatpush1.bf16.msra.mxu0 0
      %1901 = vmatprep.subr.bf16.mxu0 0
      %1902 = vmatpush1.bf16.msra.mxu0 0
      %1903 = vmatprep.subr.bf16.mxu0 0
      %1904 = vmatpush1.bf16.msra.mxu0 0
      %1905 = vmatprep.subr.bf16.mxu0 0
      %1906 = vmatpush1.bf16.msra.mxu0 0
      %1907 = vmatprep.subr.bf16.mxu0 0
      %1908 = vmatpush1.bf16.msra.mxu0 %v1880
      %1909 = vmatprep.subr.bf16.mxu0 0
      %1910 = vmatpush1.bf16.msra.mxu0 %v1879
      %1911 = vmatprep.subr.bf16.mxu0 0
      %1912 = vmatpush2.bf16.msra.mxu0 0
      %1913 = vmatprep.subr.bf16.mxu0 0
      %1914 = vmatpush2.bf16.msra.mxu0 0
      %1915 = vmatprep.subr.bf16.mxu0 0
      %1916 = vmatpush2.bf16.msra.mxu0 0
      %1917 = vmatprep.subr.bf16.mxu0 0
      %1918 = vmatpush2.bf16.msra.mxu0 0
      %1919 = vmatprep.subr.bf16.mxu0 0
      %1920 = vmatpush2.bf16.msra.mxu0 0
      %1921 = vmatprep.subr.bf16.mxu0 0
      %1922 = vmatpush2.bf16.msra.mxu0 0
      %1923 = vmatprep.subr.bf16.mxu0 0
      %1924 = vmatpush2.bf16.msra.mxu0 0
      %1925 = vmatprep.subr.bf16.mxu0 0
      %1926 = vmatpush2.bf16.msra.mxu0 0
      %1927 = vmatprep.mubr.bf16.mxu0 0
      %1928 = vmatmul.mubr.bf16.gmra.mxu0 %v1884
      %v1929 = vpop.f32.mrf.mxu0
      %v1930 = vadd.f32 0.0, %v1929
      %v1931 = vpop.f32.mrf.mxu0
      %v1932 = vpop.f32.mrf.mxu0
      %v1933 = vadd.f32 0.0, %v1932
      %v1934 = vpop.f32.mrf.mxu0
      %1935 = vmatprep.mubr.bf16.mxu0 0
      %1936 = vmatmul.mubr.bf16.gmra.mxu0 %v1887
      %v1937 = vpop.f32.mrf.mxu0
      %v1938 = vadd.f32 0.0, %v1937
      %v1939 = vpop.f32.mrf.mxu0
      %v1940 = vpop.f32.mrf.mxu0
      %v1941 = vadd.f32 0.0, %v1940
      %v1942 = vpop.f32.mrf.mxu0
      %1943 = vmatprep.mubr.bf16.mxu0 0
      %1944 = vmatmul.mubr.bf16.gmra.mxu0 %v1890
      %v1945 = vpop.f32.mrf.mxu0
      %v1946 = vadd.f32 0.0, %v1945
      %v1947 = vpop.f32.mrf.mxu0
      %v1948 = vpop.f32.mrf.mxu0
      %v1949 = vadd.f32 0.0, %v1948
      %v1950 = vpop.f32.mrf.mxu0
      %1951 = vmatprep.mubr.bf16.mxu0 0
      %1952 = vmatmul.mubr.bf16.gmra.mxu0 %v1893
      %v1953 = vpop.f32.mrf.mxu0
      %v1954 = vadd.f32 0.0, %v1953
      %v1955 = vpop.f32.mrf.mxu0
      %v1956 = vpop.f32.mrf.mxu0
      %v1957 = vadd.f32 0.0, %v1956
      %v1958 = vpop.f32.mrf.mxu0
      %1959 = vdwg.mxu0
      %v1960 = vadd.f32 %v1846, %v1930
      %v1961 = vadd.f32 %v1847, %v1933
      %v1962 = vadd.f32 %v1848, %v1938
      %v1963 = vadd.f32 %v1849, %v1941
      %v1964 = vadd.f32 %v1850, %v1946
      %v1965 = vadd.f32 %v1851, %v1949
      %v1966 = vadd.f32 %v1852, %v1954
      %v1967 = vadd.f32 %v1853, %v1957
      %s1968 = scalar_lea.vmem [#allocation2], 32
      %v1969 = vld [vmem:[%s1968] sm:$0xff]
      %v1970 = vld [vmem:[%s1968 + $0x10] sm:$0xff]
      %v1971 = vld [vmem:[%s1968 + $0x20] sm:$0xff]
      %v1972 = vld [vmem:[%s1968 + $0x30] sm:$0xff]
      %v1973 = vld [vmem:[%s1968 + $0x40] sm:$0xff]
      %v1974 = vld [vmem:[%s1968 + $0x50] sm:$0xff]
      %v1975 = vld [vmem:[%s1968 + $0x60] sm:$0xff]
      %v1976 = vld [vmem:[%s1968 + $0x70] sm:$0xff]
      %v1977 = vpack.c.bf16 %v1970, %v1969
      %v1978 = vpack.c.bf16 %v1972, %v1971
      %v1979 = vpack.c.bf16 %v1974, %v1973
      %v1980 = vpack.c.bf16 %v1976, %v1975
      %s1981 = scalar_lea.vmem %s4, 96
      %v1982 = vld [vmem:[%s1981] sm:$0xf]
      %v1983 = vld [vmem:[%s1981 + $0x4] sm:$0xf]
      %v1984 = vld [vmem:[%s1981 + $0x8] sm:$0xf]
      %v1985 = vld [vmem:[%s1981 + $0xc] sm:$0xf]
      %v1990 = vunpack.c.l.b16 %v1982
      %v1991 = vunpack.c.l.b16 %v1983
      %v1992 = vunpack.c.l.b16 %v1984
      %v1993 = vunpack.c.l.b16 %v1985
      %v1994 = vpack.c.b16 %v1991, %v1990
      %v1995 = vpack.c.b16 %v1993, %v1992
      %v1999 = vsel %vm1264, %v1977, 0
      %v2002 = vsel %vm1264, %v1978, 0
      %v2005 = vsel %vm1264, %v1979, 0
      %v2008 = vsel %vm1264, %v1980, 0
      %2010 = vmatprep.subr.bf16.mxu0 0
      %2011 = vmatpush1.bf16.msra.mxu0 0
      %2012 = vmatprep.subr.bf16.mxu0 0
      %2013 = vmatpush1.bf16.msra.mxu0 0
      %2014 = vmatprep.subr.bf16.mxu0 0
      %2015 = vmatpush1.bf16.msra.mxu0 0
      %2016 = vmatprep.subr.bf16.mxu0 0
      %2017 = vmatpush1.bf16.msra.mxu0 0
      %2018 = vmatprep.subr.bf16.mxu0 0
      %2019 = vmatpush1.bf16.msra.mxu0 0
      %2020 = vmatprep.subr.bf16.mxu0 0
      %2021 = vmatpush1.bf16.msra.mxu0 0
      %2022 = vmatprep.subr.bf16.mxu0 0
      %2023 = vmatpush1.bf16.msra.mxu0 %v1995
      %2024 = vmatprep.subr.bf16.mxu0 0
      %2025 = vmatpush1.bf16.msra.mxu0 %v1994
      %2026 = vmatprep.subr.bf16.mxu0 0
      %2027 = vmatpush2.bf16.msra.mxu0 0
      %2028 = vmatprep.subr.bf16.mxu0 0
      %2029 = vmatpush2.bf16.msra.mxu0 0
      %2030 = vmatprep.subr.bf16.mxu0 0
      %2031 = vmatpush2.bf16.msra.mxu0 0
      %2032 = vmatprep.subr.bf16.mxu0 0
      %2033 = vmatpush2.bf16.msra.mxu0 0
      %2034 = vmatprep.subr.bf16.mxu0 0
      %2035 = vmatpush2.bf16.msra.mxu0 0
      %2036 = vmatprep.subr.bf16.mxu0 0
      %2037 = vmatpush2.bf16.msra.mxu0 0
      %2038 = vmatprep.subr.bf16.mxu0 0
      %2039 = vmatpush2.bf16.msra.mxu0 0
      %2040 = vmatprep.subr.bf16.mxu0 0
      %2041 = vmatpush2.bf16.msra.mxu0 0
      %2042 = vmatprep.mubr.bf16.mxu0 0
      %2043 = vmatmul.mubr.bf16.gmra.mxu0 %v1999
      %v2044 = vpop.f32.mrf.mxu0
      %v2045 = vadd.f32 0.0, %v2044
      %v2046 = vpop.f32.mrf.mxu0
      %v2047 = vpop.f32.mrf.mxu0
      %v2048 = vadd.f32 0.0, %v2047
      %v2049 = vpop.f32.mrf.mxu0
      %2050 = vmatprep.mubr.bf16.mxu0 0
      %2051 = vmatmul.mubr.bf16.gmra.mxu0 %v2002
      %v2052 = vpop.f32.mrf.mxu0
      %v2053 = vadd.f32 0.0, %v2052
      %v2054 = vpop.f32.mrf.mxu0
      %v2055 = vpop.f32.mrf.mxu0
      %v2056 = vadd.f32 0.0, %v2055
      %v2057 = vpop.f32.mrf.mxu0
      %2058 = vmatprep.mubr.bf16.mxu0 0
      %2059 = vmatmul.mubr.bf16.gmra.mxu0 %v2005
      %v2060 = vpop.f32.mrf.mxu0
      %v2061 = vadd.f32 0.0, %v2060
      %v2062 = vpop.f32.mrf.mxu0
      %v2063 = vpop.f32.mrf.mxu0
      %v2064 = vadd.f32 0.0, %v2063
      %v2065 = vpop.f32.mrf.mxu0
      %2066 = vmatprep.mubr.bf16.mxu0 0
      %2067 = vmatmul.mubr.bf16.gmra.mxu0 %v2008
      %v2068 = vpop.f32.mrf.mxu0
      %v2069 = vadd.f32 0.0, %v2068
      %v2070 = vpop.f32.mrf.mxu0
      %v2071 = vpop.f32.mrf.mxu0
      %v2072 = vadd.f32 0.0, %v2071
      %v2073 = vpop.f32.mrf.mxu0
      %2074 = vdwg.mxu0
      %v2075 = vadd.f32 %v1960, %v2045
      %v2076 = vadd.f32 %v1961, %v2048
      %v2077 = vadd.f32 %v1962, %v2053
      %v2078 = vadd.f32 %v1963, %v2056
      %v2079 = vadd.f32 %v1964, %v2061
      %v2080 = vadd.f32 %v1965, %v2064
      %v2081 = vadd.f32 %v1966, %v2069
      %v2082 = vadd.f32 %v1967, %v2072
      %v2083 = vld [vmem:[%s1968 + $0x1] sm:$0xff]
      %v2084 = vld [vmem:[%s1968 + $0x11] sm:$0xff]
      %v2085 = vld [vmem:[%s1968 + $0x21] sm:$0xff]
      %v2086 = vld [vmem:[%s1968 + $0x31] sm:$0xff]
      %v2087 = vld [vmem:[%s1968 + $0x41] sm:$0xff]
      %v2088 = vld [vmem:[%s1968 + $0x51] sm:$0xff]
      %v2089 = vld [vmem:[%s1968 + $0x61] sm:$0xff]
      %v2090 = vld [vmem:[%s1968 + $0x71] sm:$0xff]
      %v2091 = vpack.c.bf16 %v2084, %v2083
      %v2092 = vpack.c.bf16 %v2086, %v2085
      %v2093 = vpack.c.bf16 %v2088, %v2087
      %v2094 = vpack.c.bf16 %v2090, %v2089
      %s2095 = scalar_lea.vmem %s4, 112
      %v2096 = vld [vmem:[%s2095] sm:$0xf]
      %v2097 = vld [vmem:[%s2095 + $0x4] sm:$0xf]
      %v2098 = vld [vmem:[%s2095 + $0x8] sm:$0xf]
      %v2099 = vld [vmem:[%s2095 + $0xc] sm:$0xf]
      %v2104 = vunpack.c.l.b16 %v2096
      %v2105 = vunpack.c.l.b16 %v2097
      %v2106 = vunpack.c.l.b16 %v2098
      %v2107 = vunpack.c.l.b16 %v2099
      %v2108 = vpack.c.b16 %v2105, %v2104
      %v2109 = vpack.c.b16 %v2107, %v2106
      %v2113 = vsel %vm1264, %v2091, 0
      %v2116 = vsel %vm1264, %v2092, 0
      %v2119 = vsel %vm1264, %v2093, 0
      %v2122 = vsel %vm1264, %v2094, 0
      %2124 = vmatprep.subr.bf16.mxu0 0
      %2125 = vmatpush1.bf16.msra.mxu0 0
      %2126 = vmatprep.subr.bf16.mxu0 0
      %2127 = vmatpush1.bf16.msra.mxu0 0
      %2128 = vmatprep.subr.bf16.mxu0 0
      %2129 = vmatpush1.bf16.msra.mxu0 0
      %2130 = vmatprep.subr.bf16.mxu0 0
      %2131 = vmatpush1.bf16.msra.mxu0 0
      %2132 = vmatprep.subr.bf16.mxu0 0
      %2133 = vmatpush1.bf16.msra.mxu0 0
      %2134 = vmatprep.subr.bf16.mxu0 0
      %2135 = vmatpush1.bf16.msra.mxu0 0
      %2136 = vmatprep.subr.bf16.mxu0 0
      %2137 = vmatpush1.bf16.msra.mxu0 %v2109
      %2138 = vmatprep.subr.bf16.mxu0 0
      %2139 = vmatpush1.bf16.msra.mxu0 %v2108
      %2140 = vmatprep.subr.bf16.mxu0 0
      %2141 = vmatpush2.bf16.msra.mxu0 0
      %2142 = vmatprep.subr.bf16.mxu0 0
      %2143 = vmatpush2.bf16.msra.mxu0 0
      %2144 = vmatprep.subr.bf16.mxu0 0
      %2145 = vmatpush2.bf16.msra.mxu0 0
      %2146 = vmatprep.subr.bf16.mxu0 0
      %2147 = vmatpush2.bf16.msra.mxu0 0
      %2148 = vmatprep.subr.bf16.mxu0 0
      %2149 = vmatpush2.bf16.msra.mxu0 0
      %2150 = vmatprep.subr.bf16.mxu0 0
      %2151 = vmatpush2.bf16.msra.mxu0 0
      %2152 = vmatprep.subr.bf16.mxu0 0
      %2153 = vmatpush2.bf16.msra.mxu0 0
      %2154 = vmatprep.subr.bf16.mxu0 0
      %2155 = vmatpush2.bf16.msra.mxu0 0
      %2156 = vmatprep.mubr.bf16.mxu0 0
      %2157 = vmatmul.mubr.bf16.gmra.mxu0 %v2113
      %v2158 = vpop.f32.mrf.mxu0
      %v2159 = vadd.f32 0.0, %v2158
      %v2160 = vpop.f32.mrf.mxu0
      %v2161 = vpop.f32.mrf.mxu0
      %v2162 = vadd.f32 0.0, %v2161
      %v2163 = vpop.f32.mrf.mxu0
      %2164 = vmatprep.mubr.bf16.mxu0 0
      %2165 = vmatmul.mubr.bf16.gmra.mxu0 %v2116
      %v2166 = vpop.f32.mrf.mxu0
      %v2167 = vadd.f32 0.0, %v2166
      %v2168 = vpop.f32.mrf.mxu0
      %v2169 = vpop.f32.mrf.mxu0
      %v2170 = vadd.f32 0.0, %v2169
      %v2171 = vpop.f32.mrf.mxu0
      %2172 = vmatprep.mubr.bf16.mxu0 0
      %2173 = vmatmul.mubr.bf16.gmra.mxu0 %v2119
      %v2174 = vpop.f32.mrf.mxu0
      %v2175 = vadd.f32 0.0, %v2174
      %v2176 = vpop.f32.mrf.mxu0
      %v2177 = vpop.f32.mrf.mxu0
      %v2178 = vadd.f32 0.0, %v2177
      %v2179 = vpop.f32.mrf.mxu0
      %2180 = vmatprep.mubr.bf16.mxu0 0
      %2181 = vmatmul.mubr.bf16.gmra.mxu0 %v2122
      %v2182 = vpop.f32.mrf.mxu0
      %v2183 = vadd.f32 0.0, %v2182
      %v2184 = vpop.f32.mrf.mxu0
      %v2185 = vpop.f32.mrf.mxu0
      %v2186 = vadd.f32 0.0, %v2185
      %v2187 = vpop.f32.mrf.mxu0
      %2188 = vdwg.mxu0
      %v2189 = vadd.f32 %v2075, %v2159
      %v2190 = vadd.f32 %v2076, %v2162
      %v2191 = vadd.f32 %v2077, %v2167
      %v2192 = vadd.f32 %v2078, %v2170
      %v2193 = vadd.f32 %v2079, %v2175
      %v2194 = vadd.f32 %v2080, %v2178
      %v2195 = vadd.f32 %v2081, %v2183
      %v2196 = vadd.f32 %v2082, %v2186
      %v2197 = vld [vmem:[%s1968 + $0x2] sm:$0xff]
      %v2198 = vld [vmem:[%s1968 + $0x12] sm:$0xff]
      %v2199 = vld [vmem:[%s1968 + $0x22] sm:$0xff]
      %v2200 = vld [vmem:[%s1968 + $0x32] sm:$0xff]
      %v2201 = vld [vmem:[%s1968 + $0x42] sm:$0xff]
      %v2202 = vld [vmem:[%s1968 + $0x52] sm:$0xff]
      %v2203 = vld [vmem:[%s1968 + $0x62] sm:$0xff]
      %v2204 = vld [vmem:[%s1968 + $0x72] sm:$0xff]
      %v2205 = vpack.c.bf16 %v2198, %v2197
      %v2206 = vpack.c.bf16 %v2200, %v2199
      %v2207 = vpack.c.bf16 %v2202, %v2201
      %v2208 = vpack.c.bf16 %v2204, %v2203
      %s2209 = scalar_lea.vmem %s4, 128
      %v2210 = vld [vmem:[%s2209] sm:$0xf]
      %v2211 = vld [vmem:[%s2209 + $0x4] sm:$0xf]
      %v2212 = vld [vmem:[%s2209 + $0x8] sm:$0xf]
      %v2213 = vld [vmem:[%s2209 + $0xc] sm:$0xf]
      %v2218 = vunpack.c.l.b16 %v2210
      %v2219 = vunpack.c.l.b16 %v2211
      %v2220 = vunpack.c.l.b16 %v2212
      %v2221 = vunpack.c.l.b16 %v2213
      %v2222 = vpack.c.b16 %v2219, %v2218
      %v2223 = vpack.c.b16 %v2221, %v2220
      %v2227 = vsel %vm1264, %v2205, 0
      %v2230 = vsel %vm1264, %v2206, 0
      %v2233 = vsel %vm1264, %v2207, 0
      %v2236 = vsel %vm1264, %v2208, 0
      %2238 = vmatprep.subr.bf16.mxu0 0
      %2239 = vmatpush1.bf16.msra.mxu0 0
      %2240 = vmatprep.subr.bf16.mxu0 0
      %2241 = vmatpush1.bf16.msra.mxu0 0
      %2242 = vmatprep.subr.bf16.mxu0 0
      %2243 = vmatpush1.bf16.msra.mxu0 0
      %2244 = vmatprep.subr.bf16.mxu0 0
      %2245 = vmatpush1.bf16.msra.mxu0 0
      %2246 = vmatprep.subr.bf16.mxu0 0
      %2247 = vmatpush1.bf16.msra.mxu0 0
      %2248 = vmatprep.subr.bf16.mxu0 0
      %2249 = vmatpush1.bf16.msra.mxu0 0
      %2250 = vmatprep.subr.bf16.mxu0 0
      %2251 = vmatpush1.bf16.msra.mxu0 %v2223
      %2252 = vmatprep.subr.bf16.mxu0 0
      %2253 = vmatpush1.bf16.msra.mxu0 %v2222
      %2254 = vmatprep.subr.bf16.mxu0 0
      %2255 = vmatpush2.bf16.msra.mxu0 0
      %2256 = vmatprep.subr.bf16.mxu0 0
      %2257 = vmatpush2.bf16.msra.mxu0 0
      %2258 = vmatprep.subr.bf16.mxu0 0
      %2259 = vmatpush2.bf16.msra.mxu0 0
      %2260 = vmatprep.subr.bf16.mxu0 0
      %2261 = vmatpush2.bf16.msra.mxu0 0
      %2262 = vmatprep.subr.bf16.mxu0 0
      %2263 = vmatpush2.bf16.msra.mxu0 0
      %2264 = vmatprep.subr.bf16.mxu0 0
      %2265 = vmatpush2.bf16.msra.mxu0 0
      %2266 = vmatprep.subr.bf16.mxu0 0
      %2267 = vmatpush2.bf16.msra.mxu0 0
      %2268 = vmatprep.subr.bf16.mxu0 0
      %2269 = vmatpush2.bf16.msra.mxu0 0
      %2270 = vmatprep.mubr.bf16.mxu0 0
      %2271 = vmatmul.mubr.bf16.gmra.mxu0 %v2227
      %v2272 = vpop.f32.mrf.mxu0
      %v2273 = vadd.f32 0.0, %v2272
      %v2274 = vpop.f32.mrf.mxu0
      %v2275 = vpop.f32.mrf.mxu0
      %v2276 = vadd.f32 0.0, %v2275
      %v2277 = vpop.f32.mrf.mxu0
      %2278 = vmatprep.mubr.bf16.mxu0 0
      %2279 = vmatmul.mubr.bf16.gmra.mxu0 %v2230
      %v2280 = vpop.f32.mrf.mxu0
      %v2281 = vadd.f32 0.0, %v2280
      %v2282 = vpop.f32.mrf.mxu0
      %v2283 = vpop.f32.mrf.mxu0
      %v2284 = vadd.f32 0.0, %v2283
      %v2285 = vpop.f32.mrf.mxu0
      %2286 = vmatprep.mubr.bf16.mxu0 0
      %2287 = vmatmul.mubr.bf16.gmra.mxu0 %v2233
      %v2288 = vpop.f32.mrf.mxu0
      %v2289 = vadd.f32 0.0, %v2288
      %v2290 = vpop.f32.mrf.mxu0
      %v2291 = vpop.f32.mrf.mxu0
      %v2292 = vadd.f32 0.0, %v2291
      %v2293 = vpop.f32.mrf.mxu0
      %2294 = vmatprep.mubr.bf16.mxu0 0
      %2295 = vmatmul.mubr.bf16.gmra.mxu0 %v2236
      %v2296 = vpop.f32.mrf.mxu0
      %v2297 = vadd.f32 0.0, %v2296
      %v2298 = vpop.f32.mrf.mxu0
      %v2299 = vpop.f32.mrf.mxu0
      %v2300 = vadd.f32 0.0, %v2299
      %v2301 = vpop.f32.mrf.mxu0
      %2302 = vdwg.mxu0
      %v2303 = vadd.f32 %v2189, %v2273
      %v2304 = vadd.f32 %v2190, %v2276
      %v2305 = vadd.f32 %v2191, %v2281
      %v2306 = vadd.f32 %v2192, %v2284
      %v2307 = vadd.f32 %v2193, %v2289
      %v2308 = vadd.f32 %v2194, %v2292
      %v2309 = vadd.f32 %v2195, %v2297
      %v2310 = vadd.f32 %v2196, %v2300
      %v2311 = vld [vmem:[%s5] sm:$0x1]
      %v2313 = vlaneseq
      %v2314 = vshrl.u32 %v2313, 7
      %v2315 = vsub.s32 0, %v2314
      %v2316 = vrot.slane %v2311, %v2315
      %v2318 = vadd.f32 %v2303, %v2316
      %v2319 = vadd.f32 %v2304, %v2316
      %v2320 = vadd.f32 %v2305, %v2316
      %v2321 = vadd.f32 %v2306, %v2316
      %v2322 = vadd.f32 %v2307, %v2316
      %v2323 = vadd.f32 %v2308, %v2316
      %v2324 = vadd.f32 %v2309, %v2316
      %v2325 = vadd.f32 %v2310, %v2316
      %v2326 = vxor.u32 %v2318, 2147483648
      %v2327 = vxor.u32 %v2319, 2147483648
      %v2328 = vxor.u32 %v2320, 2147483648
      %v2329 = vxor.u32 %v2321, 2147483648
      %v2330 = vxor.u32 %v2322, 2147483648
      %v2331 = vxor.u32 %v2323, 2147483648
      %v2332 = vxor.u32 %v2324, 2147483648
      %v2333 = vxor.u32 %v2325, 2147483648
      %v2334 = vmul.f32 %v2326, 1.442695
      %v2335 = vpow.pop %v2334
      %v2336 = vmul.f32 %v2327, 1.442695
      %v2337 = vpow.pop %v2336
      %v2338 = vmul.f32 %v2328, 1.442695
      %v2339 = vpow.pop %v2338
      %v2340 = vmul.f32 %v2329, 1.442695
      %v2341 = vpow.pop %v2340
      %v2342 = vmul.f32 %v2330, 1.442695
      %v2343 = vpow.pop %v2342
      %v2344 = vmul.f32 %v2331, 1.442695
      %v2345 = vpow.pop %v2344
      %v2346 = vmul.f32 %v2332, 1.442695
      %v2347 = vpow.pop %v2346
      %v2348 = vmul.f32 %v2333, 1.442695
      %v2349 = vpow.pop %v2348
      %v2350 = vadd.f32 %v2335, 1.0
      %v2351 = vadd.f32 %v2337, 1.0
      %v2352 = vadd.f32 %v2339, 1.0
      %v2353 = vadd.f32 %v2341, 1.0
      %v2354 = vadd.f32 %v2343, 1.0
      %v2355 = vadd.f32 %v2345, 1.0
      %v2356 = vadd.f32 %v2347, 1.0
      %v2357 = vadd.f32 %v2349, 1.0
      %v2358 = vrcp.pop %v2350
      %v2359 = vmul.f32 1.0, %v2358
      %v2360 = vrcp.pop %v2351
      %v2361 = vmul.f32 1.0, %v2360
      %v2362 = vrcp.pop %v2352
      %v2363 = vmul.f32 1.0, %v2362
      %v2364 = vrcp.pop %v2353
      %v2365 = vmul.f32 1.0, %v2364
      %v2366 = vrcp.pop %v2354
      %v2367 = vmul.f32 1.0, %v2366
      %v2368 = vrcp.pop %v2355
      %v2369 = vmul.f32 1.0, %v2368
      %v2370 = vrcp.pop %v2356
      %v2371 = vmul.f32 1.0, %v2370
      %v2372 = vrcp.pop %v2357
      %v2373 = vmul.f32 1.0, %v2372
      %v2374 = vld [vmem:[%s289] sm:$0xff]
      %v2375 = vld [vmem:[%s289 + $0x8] sm:$0xff]
      %v2376 = vld [vmem:[%s289 + $0x10] sm:$0xff]
      %v2377 = vld [vmem:[%s289 + $0x18] sm:$0xff]
      %v2378 = vld [vmem:[%s289 + $0x20] sm:$0xff]
      %v2379 = vld [vmem:[%s289 + $0x28] sm:$0xff]
      %v2380 = vld [vmem:[%s289 + $0x30] sm:$0xff]
      %v2381 = vld [vmem:[%s289 + $0x38] sm:$0xff]
      %s2382 = sld [smem:[#allocation3]]
      %2384 = vset.pattern.permute.xlu0 0
      %2385 = vperm.xlu0 %2384, %v2359
      %v2386 = vpop.permute.xlu0 %2385
      %2389 = vset.pattern.permute.xlu0 0
      %2390 = vperm.xlu0 %2389, %v2361
      %v2391 = vpop.permute.xlu0 %2390
      %2394 = vset.pattern.permute.xlu0 0
      %2395 = vperm.xlu0 %2394, %v2363
      %v2396 = vpop.permute.xlu0 %2395
      %2399 = vset.pattern.permute.xlu0 0
      %2400 = vperm.xlu0 %2399, %v2365
      %v2401 = vpop.permute.xlu0 %2400
      %2404 = vset.pattern.permute.xlu0 0
      %2405 = vperm.xlu0 %2404, %v2367
      %v2406 = vpop.permute.xlu0 %2405
      %2409 = vset.pattern.permute.xlu0 0
      %2410 = vperm.xlu0 %2409, %v2369
      %v2411 = vpop.permute.xlu0 %2410
      %2414 = vset.pattern.permute.xlu0 0
      %2415 = vperm.xlu0 %2414, %v2371
      %v2416 = vpop.permute.xlu0 %2415
      %2419 = vset.pattern.permute.xlu0 0
      %2420 = vperm.xlu0 %2419, %v2373
      %v2421 = vpop.permute.xlu0 %2420
      %v2423 = vmul.f32 %v2386, %v2374
      %v2424 = vmul.f32 %v2391, %v2375
      %v2425 = vmul.f32 %v2396, %v2376
      %v2426 = vmul.f32 %v2401, %v2377
      %v2427 = vmul.f32 %v2406, %v2378
      %v2428 = vmul.f32 %v2411, %v2379
      %v2429 = vmul.f32 %v2416, %v2380
      %v2430 = vmul.f32 %v2421, %v2381
      %v2431 = vstv %s2382
      %v2432 = vmul.f32 %v2431, %v2423
      %v2433 = vmul.f32 %v2431, %v2424
      %v2434 = vmul.f32 %v2431, %v2425
      %v2435 = vmul.f32 %v2431, %v2426
      %v2436 = vmul.f32 %v2431, %v2427
      %v2437 = vmul.f32 %v2431, %v2428
      %v2438 = vmul.f32 %v2431, %v2429
      %v2439 = vmul.f32 %v2431, %v2430
      %2448 = vrot.lane.b32.xlu0 %v2318, 127
      %v2449 = vpop.permute.xlu0 %2448
      %2450 = vrot.lane.b32.xlu0 %v2319, 127
      %v2451 = vpop.permute.xlu0 %2450
      %2452 = vrot.lane.b32.xlu0 %v2320, 127
      %v2453 = vpop.permute.xlu0 %2452
      %2454 = vrot.lane.b32.xlu0 %v2321, 127
      %v2455 = vpop.permute.xlu0 %2454
      %2456 = vrot.lane.b32.xlu0 %v2322, 127
      %v2457 = vpop.permute.xlu0 %2456
      %2458 = vrot.lane.b32.xlu0 %v2323, 127
      %v2459 = vpop.permute.xlu0 %2458
      %2460 = vrot.lane.b32.xlu0 %v2324, 127
      %v2461 = vpop.permute.xlu0 %2460
      %2462 = vrot.lane.b32.xlu0 %v2325, 127
      %v2463 = vpop.permute.xlu0 %2462
      %v2472 = vadd.f32 %v2432, %v2449
      %v2473 = vadd.f32 %v2433, %v2451
      %v2474 = vadd.f32 %v2434, %v2453
      %v2475 = vadd.f32 %v2435, %v2455
      %v2476 = vadd.f32 %v2436, %v2457
      %v2477 = vadd.f32 %v2437, %v2459
      %v2478 = vadd.f32 %v2438, %v2461
      %v2479 = vadd.f32 %v2439, %v2463
      %2480 = vrot.lane.b32.xlu0 %v2359, 8
      %v2481 = vpop.permute.xlu0 %2480
      %2482 = vrot.lane.b32.xlu0 %v2361, 8
      %v2483 = vpop.permute.xlu0 %2482
      %2484 = vrot.lane.b32.xlu0 %v2363, 8
      %v2485 = vpop.permute.xlu0 %2484
      %2486 = vrot.lane.b32.xlu0 %v2365, 8
      %v2487 = vpop.permute.xlu0 %2486
      %2488 = vrot.lane.b32.xlu0 %v2367, 8
      %v2489 = vpop.permute.xlu0 %2488
      %2490 = vrot.lane.b32.xlu0 %v2369, 8
      %v2491 = vpop.permute.xlu0 %2490
      %2492 = vrot.lane.b32.xlu0 %v2371, 8
      %v2493 = vpop.permute.xlu0 %2492
      %2494 = vrot.lane.b32.xlu0 %v2373, 8
      %v2495 = vpop.permute.xlu0 %2494
      %vm2504 = vcmask 64512
      %v2505 = vsel %vm2504, %v2472, %v2481
      %v2506 = vsel %vm2504, %v2473, %v2483
      %v2507 = vsel %vm2504, %v2474, %v2485
      %v2508 = vsel %vm2504, %v2475, %v2487
      %v2509 = vsel %vm2504, %v2476, %v2489
      %v2510 = vsel %vm2504, %v2477, %v2491
      %v2511 = vsel %vm2504, %v2478, %v2493
      %v2512 = vsel %vm2504, %v2479, %v2495
      %vm2513 = vcmask 72704
      %2514 = vst.msk [vmem:[%s299] sm:$0xff] %vm2513, %v2505
      %2515 = vst.msk [vmem:[%s299 + $0x8] sm:$0xff] %vm2513, %v2506
      %2516 = vst.msk [vmem:[%s299 + $0x10] sm:$0xff] %vm2513, %v2507
      %2517 = vst.msk [vmem:[%s299 + $0x18] sm:$0xff] %vm2513, %v2508
      %2518 = vst.msk [vmem:[%s299 + $0x20] sm:$0xff] %vm2513, %v2509
      %2519 = vst.msk [vmem:[%s299 + $0x28] sm:$0xff] %vm2513, %v2510
      %2520 = vst.msk [vmem:[%s299 + $0x30] sm:$0xff] %vm2513, %v2511
      %2521 = vst.msk [vmem:[%s299 + $0x38] sm:$0xff] %vm2513, %v2512
      %p2522 = scmp.lt.s32.totalorder %s19, 1
      %s2523 = scalar_select %p2522, %s19, 1
      %s2524 = smul.addr %s2523, 8
      %s2525 = smul.addr %s2524, 8
      %s2526 = scalar_lea.vmem %s7, %s2525
      // Predicated region
      $region49: #{tpu_custom_call.1} parent=47 // pred_check
        %p2527 = pneg %p194
      $region50: #{tpu_custom_call.1} parent=47 // pred_check_branch
        %2529 = sbr.rel (%p2527) target = $region52
      $region51: #{tpu_custom_call.1} parent=47 // pred_region
        _
      $region52: #{tpu_custom_call.1} parent=47 // pred_fallthru
        _
    $region48: #{tpu_custom_call.1} parent=5 // pred_fallthru
      _
    %p2530 = scmp.le.s32.totalorder 2, %s14
    // Predicated region
    $region53: #{tpu_custom_call.1} parent=5 // pred_check
      %p2531 = pneg %p2530
    $region54: #{tpu_custom_call.1} parent=5 // pred_check_branch
      %2533 = sbr.rel (%p2531) target = $region56
    $region55: #{tpu_custom_call.1} parent=5 // pred_region
      %s2534 = ssub.s32 %s14, 2
      // Predicated region
      $region57: #{tpu_custom_call.1} parent=55 // pred_check
        %p2535 = pneg %p200
      $region58: #{tpu_custom_call.1} parent=55 // pred_check_branch
        %2537 = sbr.rel (%p2535) target = $region60
      $region59: #{tpu_custom_call.1} parent=55 // pred_region
        %p2538 = scmp.lt.s32.totalorder %s20, 1
        %s2539 = scalar_select %p2538, %s20, 1
        %s2540 = smul.addr %s2539, 8
        %s2541 = smul.addr %s2540, 8
        %s2542 = scalar_lea.vmem %s7, %s2541
      $region60: #{tpu_custom_call.1} parent=55 // pred_fallthru
        _
    $region56: #{tpu_custom_call.1} parent=5 // pred_fallthru
      _
  $region6: #{tpu_custom_call.1} parent=0 // loop_footer
    %s18 = sadd.s32 1, %s14
  $region7: #{tpu_custom_call.1} parent=0 // loop_footer_branch
    %13 = sbr.rel target = $region3
  $region8: #{tpu_custom_call.1} parent=0 // loop_exit
    _

</llo_original>
